<compile_context>
chip_gen: v6e
topology: v6e:2x2x1
jax: 0.10.0
libtpu: 0.0.40
codegen_flags: <defaults>
</compile_context>

<pallas_src>
import functools

import jax
import jax.numpy as jnp
from jax.experimental import pallas as pl
from jax.experimental.pallas import tpu as pltpu


# ----------------------------------------------------------------------------
# kernels
# ----------------------------------------------------------------------------
def _spatial_sum_kernel(x_ref, sum_ref):
    """Accumulate the sum over the flattened H*W axis (adaptive_avg_pool2d numerator).

    Grid axis = H*W tiles, "arbitrary" (the output block is revisited / accumulated)."""
    @pl.when(pl.program_id(0) == 0)
    def _init():
        sum_ref[...] = jnp.zeros_like(sum_ref)

    sum_ref[...] += jnp.sum(x_ref[...], axis=-1, keepdims=True)   # (bt, C, 1)


def _film_coeff_kernel(xsum_ref, z_ref, wzx_ref, wzz_ref, wbx_ref, wbz_ref,
                       bw_ref, bb_ref, scale_ref, shift_ref, zinfo_ref, *, inv_hw):
    """Fused w_lin + b_lin + z_info in a single launch.

    torch:  zz = cat([x_c, z.repeat(bt, 1)], -1);  w_z = zz @ Wz.T + bwz
    here :  zz @ Wz.T == x_c @ Wz[:, :C].T + z @ Wz[:, C:].T   (z is identical per row),
    which avoids any in-kernel concat and keeps every op layout-natural."""
    x_c = xsum_ref[...] * inv_hw                                   # (bt, C)  avg pool
    z = z_ref[...]                                                 # (1, C)
    w_z = (jnp.dot(x_c, wzx_ref[...], preferred_element_type=jnp.float32)
           + jnp.dot(z, wzz_ref[...], preferred_element_type=jnp.float32)
           + bw_ref[...])                                          # (bt, C)
    b_z = (jnp.dot(x_c, wbx_ref[...], preferred_element_type=jnp.float32)
           + jnp.dot(z, wbz_ref[...], preferred_element_type=jnp.float32)
           + bb_ref[...])                                          # (bt, C)
    scale_ref[...] = 1.0 + w_z                                     # out = x*(1+w_z) + b_z
    shift_ref[...] = b_z
    zinfo_ref[...] = jnp.mean(w_z + b_z, axis=0, keepdims=True)    # (1, C)


def _film_modulate_kernel(x_ref, scale_ref, shift_ref, o_ref):
    """out = x + w_z*x + b_z over a lane-dense H*W tile. Grid axis "parallel"."""
    o_ref[...] = x_ref[...] * scale_ref[...] + shift_ref[...]


# ----------------------------------------------------------------------------
# wrapper
# ----------------------------------------------------------------------------
def _pick_hw_tile(hw, rows, vmem_budget_bytes=8 << 20, max_tile=2048):
    """Largest 128-multiple tile of the flattened H*W axis that divides it evenly and
    keeps the double-buffered f32 working set (x in + out) under the VMEM budget.
    If H*W is not a multiple of 128, fall back to a single full-extent block
    (allowed by the (8,128) rule)."""
    if hw % 128 != 0:
        return hw
    bytes_per_lane = max(rows, 1) * 4 * 4          # rows sublanes * f32 * (2 bufs * (in+out))
    cap = min(max_tile, max(128, vmem_budget_bytes // bytes_per_lane))
    best, t = 128, 128
    lim = min(hw, cap)
    while t <= lim:
        if hw % t == 0:
            best = t
        t += 128
    return best


def prepare_film_params(params):
    """Hoist all weight-side reshapes / transposes / splits out of the hot path."""
    wz = jnp.asarray(params["w_lin"]["w"], jnp.float32)    # (C, 2C), torch (out, in) layout
    wb = jnp.asarray(params["b_lin"]["w"], jnp.float32)    # (C, 2C)
    C = wz.shape[0]
    return {
        "wz_x": wz[:, :C].T, "wz_z": wz[:, C:].T,          # (C, C) each
        "wb_x": wb[:, :C].T, "wb_z": wb[:, C:].T,
        "bw": jnp.asarray(params["w_lin"]["b"], jnp.float32).reshape(1, C),
        "bb": jnp.asarray(params["b_lin"]["b"], jnp.float32).reshape(1, C),
    }


def flim_forward(prep, x, z):
    """FliM_Block.forward(x, z) -> (out, z_info).  x: (bt, C, H, W), z: (1, C)."""
    bt, C, H, W = x.shape
    HW = H * W
    x = x.astype(jnp.float32)
    z = z.astype(jnp.float32).reshape(1, C)
    x3 = x.reshape(bt, C, HW)                      # contiguous reshape, no transpose

    hw_tile = _pick_hw_tile(HW, bt * C)
    nt = HW // hw_tile

    # --- kernel 1: global average pool (tiled, pipelined reduction over H*W) -----------
    x_sum = pl.pallas_call(
        _spatial_sum_kernel,
        out_shape=jax.ShapeDtypeStruct((bt, C, 1), jnp.float32),
        grid=(nt,),
        in_specs=[pl.BlockSpec((bt, C, hw_tile), lambda i: (0, 0, i))],
        out_specs=pl.BlockSpec((bt, C, 1), lambda i: (0, 0, 0)),
        compiler_params=pltpu.CompilerParams(dimension_semantics=("arbitrary",)),
    )(x3)

    # --- kernel 2: fused w_lin + b_lin + z_info (one tiny launch, whole problem fits) --
    full2d = lambda shape: pl.BlockSpec(shape, lambda i: (0, 0))
    scale, shift, z_info = pl.pallas_call(
        functools.partial(_film_coeff_kernel, inv_hw=1.0 / HW),
        out_shape=(jax.ShapeDtypeStruct((bt, C), jnp.float32),
                   jax.ShapeDtypeStruct((bt, C), jnp.float32),
                   jax.ShapeDtypeStruct((1, C), jnp.float32)),
        grid=(1,),
        in_specs=[full2d((bt, C)), full2d((1, C)),
                  full2d((C, C)), full2d((C, C)), full2d((C, C)), full2d((C, C)),
                  full2d((1, C)), full2d((1, C))],
        out_specs=(full2d((bt, C)), full2d((bt, C)), full2d((1, C))),
        compiler_params=pltpu.CompilerParams(dimension_semantics=("arbitrary",)),
    )(x_sum.reshape(bt, C), z, prep["wz_x"], prep["wz_z"], prep["wb_x"], prep["wb_z"],
      prep["bw"], prep["bb"])

    # --- kernel 3: FiLM modulation, lane-dense output, "parallel" grid (v7x 2 TCs) -----
    out = pl.pallas_call(
        _film_modulate_kernel,
        out_shape=jax.ShapeDtypeStruct((bt, C, HW), jnp.float32),
        grid=(nt,),
        in_specs=[pl.BlockSpec((bt, C, hw_tile), lambda i: (0, 0, i)),
                  pl.BlockSpec((bt, C, 1), lambda i: (0, 0, 0)),
                  pl.BlockSpec((bt, C, 1), lambda i: (0, 0, 0))],
        out_specs=pl.BlockSpec((bt, C, hw_tile), lambda i: (0, 0, i)),
        compiler_params=pltpu.CompilerParams(dimension_semantics=("parallel",)),
    )(x3, scale.reshape(bt, C, 1), shift.reshape(bt, C, 1))

    return out.reshape(bt, C, H, W), z_info


# ----------------------------------------------------------------------------
# pure-JAX reference (mirrors the PyTorch forward) for validation
# ----------------------------------------------------------------------------
def flim_reference(params, x, z):
    bt = x.shape[0]
    x_c = jnp.mean(x, axis=(2, 3))
    zz = jnp.concatenate([x_c, jnp.tile(z.reshape(1, -1), (bt, 1))], axis=-1)
    w_z = zz @ params["w_lin"]["w"].T + params["w_lin"]["b"]
    b_z = zz @ params["b_lin"]["w"].T + params["b_lin"]["b"]
    z_info = jnp.mean(w_z + b_z, axis=0, keepdims=True)
    out = x + w_z[:, :, None, None] * x + b_z[:, :, None, None]
    return out, z_info


# ----------------------------------------------------------------------------
# main
# ----------------------------------------------------------------------------
if __name__ == "__main__":
    key = jax.random.PRNGKey(0)
    cases = [
        (8, 32, 16, 16),   # H*W = 256  -> single 128-aligned block
        (8, 32, 48, 48),   # H*W = 2304 -> tiled grid (pipelined / megacore-parallel)
        (4, 16, 10, 10),   # H*W = 100  -> not a 128 multiple: full-extent block path
    ]
    fwd = jax.jit(flim_forward)

    for (bt, C, H, W) in cases:
        key, kw1, kb1, kw2, kb2, kx, kz = jax.random.split(key, 7)
        params = {
            "w_lin": {"w": jax.random.normal(kw1, (C, 2 * C), jnp.float32) * 0.1,
                      "b": jax.random.normal(kb1, (C,), jnp.float32) * 0.01},
            "b_lin": {"w": jax.random.normal(kw2, (C, 2 * C), jnp.float32) * 0.1,
                      "b": jax.random.normal(kb2, (C,), jnp.float32) * 0.01},
        }
        prep = prepare_film_params(params)            # hoisted out of the hot path
        x = jax.random.normal(kx, (bt, C, H, W), jnp.float32)
        z = jax.random.normal(kz, (1, C), jnp.float32)

        out, z_info = fwd(prep, x, z)
        jax.block_until_ready(out)
        jax.block_until_ready(z_info)

        assert out.shape == (bt, C, H, W), out.shape
        assert z_info.shape == (1, C), z_info.shape

        ref_out, ref_zinfo = flim_reference(params, x, z)
        err_o = float(jnp.max(jnp.abs(out - ref_out)))
        err_z = float(jnp.max(jnp.abs(z_info - ref_zinfo)))
        assert err_o < 1e-4 and err_z < 1e-4, (err_o, err_z)

    print("KERNEL_OK")
</pallas_src>

<mosaic_0001>
module attributes {stable_mosaic.version = 11 : i64} {
  func.func @_spatial_sum_kernel(%arg0: i32, %arg1: memref<8x32x256xf32, #tpu.memory_space<vmem>>, %arg2: memref<8x32x1xf32, #tpu.memory_space<vmem>>) attributes {dimension_semantics = [#tpu.dimension_semantics<arbitrary>], iteration_bounds = array<i64: 1>, scalar_prefetch = 0 : i64, scratch_operands = 0 : i64, tpu.core_type = #tpu.core_type<tc>, window_params = [{transform_indices = @transform_0, window_bounds = array<i64: 8, 32, 256>}, {pipeline_mode = #tpu.pipeline_mode<synchronous>, transform_indices = @transform_1, window_bounds = array<i64: 8, 32, 1>}]} {
    %c0_i32 = arith.constant 0 : i32
    %0 = arith.cmpi eq, %arg0, %c0_i32 : i32
    %1 = arith.extui %0 : i1 to i32
    %c0_i32_0 = arith.constant 0 : i32
    %2 = arith.cmpi ne, %1, %c0_i32_0 : i32
    scf.if %2 {
      %cst_9 = arith.constant 0.000000e+00 : f32
      %9 = vector.broadcast %cst_9 : f32 to vector<8x32x1xf32>
      %c0_10 = arith.constant 0 : index
      %c0_11 = arith.constant 0 : index
      %c0_12 = arith.constant 0 : index
      %10 = vector.load %arg2[%c0_10, %c0_11, %c0_12] : memref<8x32x1xf32, #tpu.memory_space<vmem>>, vector<8x32x1xf32>
      tpu.vector_store %arg2[%c0_10, %c0_11, %c0_12], %9 {strides = array<i32>} : memref<8x32x1xf32, #tpu.memory_space<vmem>>, vector<8x32x1xf32>,
    } else {
    }
    %c0 = arith.constant 0 : index
    %c0_1 = arith.constant 0 : index
    %c0_2 = arith.constant 0 : index
    %3 = vector.load %arg2[%c0, %c0_1, %c0_2] : memref<8x32x1xf32, #tpu.memory_space<vmem>>, vector<8x32x1xf32>
    %c0_3 = arith.constant 0 : index
    %c0_4 = arith.constant 0 : index
    %c0_5 = arith.constant 0 : index
    %4 = vector.load %arg1[%c0_3, %c0_4, %c0_5] : memref<8x32x256xf32, #tpu.memory_space<vmem>>, vector<8x32x256xf32>
    %cst = arith.constant dense<0.000000e+00> : vector<8x32xf32>
    %5 = vector.multi_reduction <add>, %4, %cst [2] : vector<8x32x256xf32> to vector<8x32xf32>
    %6 = vector.shape_cast %5 : vector<8x32xf32> to vector<8x32x1xf32>
    %7 = arith.addf %3, %6 : vector<8x32x1xf32>
    %c0_6 = arith.constant 0 : index
    %c0_7 = arith.constant 0 : index
    %c0_8 = arith.constant 0 : index
    %8 = vector.load %arg2[%c0_6, %c0_7, %c0_8] : memref<8x32x1xf32, #tpu.memory_space<vmem>>, vector<8x32x1xf32>
    tpu.vector_store %arg2[%c0_6, %c0_7, %c0_8], %7 {strides = array<i32>} : memref<8x32x1xf32, #tpu.memory_space<vmem>>, vector<8x32x1xf32>,
    return
  }
  func.func @transform_0(%arg0: i32) -> (i32, i32, i32) {
    %c0_i32 = arith.constant 0 : i32
    %c0_i32_0 = arith.constant 0 : i32
    %c0_i32_1 = arith.constant 0 : i32
    return %c0_i32, %c0_i32_0, %arg0 : i32, i32, i32
  }
  func.func @transform_1(%arg0: i32) -> (i32, i32, i32) {
    %c0_i32 = arith.constant 0 : i32
    %c0_i32_0 = arith.constant 0 : i32
    %c0_i32_1 = arith.constant 0 : i32
    %c0_i32_2 = arith.constant 0 : i32
    return %c0_i32, %c0_i32_0, %c0_i32_1 : i32, i32, i32
  }
}

module attributes {stable_mosaic.version = 11 : i64} {
  func.func @_film_coeff_kernel(%arg0: i32, %arg1: memref<8x32xf32, #tpu.memory_space<vmem>>, %arg2: memref<1x32xf32, #tpu.memory_space<vmem>>, %arg3: memref<32x32xf32, #tpu.memory_space<vmem>>, %arg4: memref<32x32xf32, #tpu.memory_space<vmem>>, %arg5: memref<32x32xf32, #tpu.memory_space<vmem>>, %arg6: memref<32x32xf32, #tpu.memory_space<vmem>>, %arg7: memref<1x32xf32, #tpu.memory_space<vmem>>, %arg8: memref<1x32xf32, #tpu.memory_space<vmem>>, %arg9: memref<8x32xf32, #tpu.memory_space<vmem>>, %arg10: memref<8x32xf32, #tpu.memory_space<vmem>>, %arg11: memref<1x32xf32, #tpu.memory_space<vmem>>) attributes {dimension_semantics = [#tpu.dimension_semantics<arbitrary>], iteration_bounds = array<i64: 1>, scalar_prefetch = 0 : i64, scratch_operands = 0 : i64, tpu.core_type = #tpu.core_type<tc>, window_params = [{pipeline_mode = #tpu.pipeline_mode<synchronous>, transform_indices = @transform_0, window_bounds = array<i64: 8, 32>}, {pipeline_mode = #tpu.pipeline_mode<synchronous>, transform_indices = @transform_1, window_bounds = array<i64: 1, 32>}, {pipeline_mode = #tpu.pipeline_mode<synchronous>, transform_indices = @transform_2, window_bounds = array<i64: 32, 32>}, {pipeline_mode = #tpu.pipeline_mode<synchronous>, transform_indices = @transform_3, window_bounds = array<i64: 32, 32>}, {pipeline_mode = #tpu.pipeline_mode<synchronous>, transform_indices = @transform_4, window_bounds = array<i64: 32, 32>}, {pipeline_mode = #tpu.pipeline_mode<synchronous>, transform_indices = @transform_5, window_bounds = array<i64: 32, 32>}, {pipeline_mode = #tpu.pipeline_mode<synchronous>, transform_indices = @transform_6, window_bounds = array<i64: 1, 32>}, {pipeline_mode = #tpu.pipeline_mode<synchronous>, transform_indices = @transform_7, window_bounds = array<i64: 1, 32>}, {pipeline_mode = #tpu.pipeline_mode<synchronous>, transform_indices = @transform_8, window_bounds = array<i64: 8, 32>}, {pipeline_mode = #tpu.pipeline_mode<synchronous>, transform_indices = @transform_9, window_bounds = array<i64: 8, 32>}, {pipeline_mode = #tpu.pipeline_mode<synchronous>, transform_indices = @transform_10, window_bounds = array<i64: 1, 32>}]} {
    %c0 = arith.constant 0 : index
    %c0_0 = arith.constant 0 : index
    %0 = vector.load %arg1[%c0, %c0_0] : memref<8x32xf32, #tpu.memory_space<vmem>>, vector<8x32xf32>
    %cst = arith.constant 3.906250e-03 : f32
    %1 = vector.broadcast %cst : f32 to vector<8x32xf32>
    %2 = arith.mulf %0, %1 : vector<8x32xf32>
    %c0_1 = arith.constant 0 : index
    %c0_2 = arith.constant 0 : index
    %3 = vector.load %arg2[%c0_1, %c0_2] : memref<1x32xf32, #tpu.memory_space<vmem>>, vector<1x32xf32>
    %c0_3 = arith.constant 0 : index
    %c0_4 = arith.constant 0 : index
    %4 = vector.load %arg3[%c0_3, %c0_4] : memref<32x32xf32, #tpu.memory_space<vmem>>, vector<32x32xf32>
    %cst_5 = arith.constant dense<0.000000e+00> : vector<8x32xf32>
    %5 = tpu.matmul %2, %4, %cst_5 {dimension_numbers = #tpu.dot_dimension_numbers<[1], [0], [0], [1], [0, 0, 1, 1], [], []>} : vector<8x32xf32>, vector<32x32xf32>, vector<8x32xf32> -> vector<8x32xf32>
    %c0_6 = arith.constant 0 : index
    %c0_7 = arith.constant 0 : index
    %6 = vector.load %arg4[%c0_6, %c0_7] : memref<32x32xf32, #tpu.memory_space<vmem>>, vector<32x32xf32>
    %cst_8 = arith.constant dense<0.000000e+00> : vector<1x32xf32>
    %7 = tpu.matmul %3, %6, %cst_8 {dimension_numbers = #tpu.dot_dimension_numbers<[1], [0], [0], [1], [0, 0, 1, 1], [], []>} : vector<1x32xf32>, vector<32x32xf32>, vector<1x32xf32> -> vector<1x32xf32>
    %8 = vector.broadcast %7 : vector<1x32xf32> to vector<8x32xf32>
    %9 = arith.addf %5, %8 : vector<8x32xf32>
    %c0_9 = arith.constant 0 : index
    %c0_10 = arith.constant 0 : index
    %10 = vector.load %arg7[%c0_9, %c0_10] : memref<1x32xf32, #tpu.memory_space<vmem>>, vector<1x32xf32>
    %11 = vector.broadcast %10 : vector<1x32xf32> to vector<8x32xf32>
    %12 = arith.addf %9, %11 : vector<8x32xf32>
    %c0_11 = arith.constant 0 : index
    %c0_12 = arith.constant 0 : index
    %13 = vector.load %arg5[%c0_11, %c0_12] : memref<32x32xf32, #tpu.memory_space<vmem>>, vector<32x32xf32>
    %cst_13 = arith.constant dense<0.000000e+00> : vector<8x32xf32>
    %14 = tpu.matmul %2, %13, %cst_13 {dimension_numbers = #tpu.dot_dimension_numbers<[1], [0], [0], [1], [0, 0, 1, 1], [], []>} : vector<8x32xf32>, vector<32x32xf32>, vector<8x32xf32> -> vector<8x32xf32>
    %c0_14 = arith.constant 0 : index
    %c0_15 = arith.constant 0 : index
    %15 = vector.load %arg6[%c0_14, %c0_15] : memref<32x32xf32, #tpu.memory_space<vmem>>, vector<32x32xf32>
    %cst_16 = arith.constant dense<0.000000e+00> : vector<1x32xf32>
    %16 = tpu.matmul %3, %15, %cst_16 {dimension_numbers = #tpu.dot_dimension_numbers<[1], [0], [0], [1], [0, 0, 1, 1], [], []>} : vector<1x32xf32>, vector<32x32xf32>, vector<1x32xf32> -> vector<1x32xf32>
    %17 = vector.broadcast %16 : vector<1x32xf32> to vector<8x32xf32>
    %18 = arith.addf %14, %17 : vector<8x32xf32>
    %c0_17 = arith.constant 0 : index
    %c0_18 = arith.constant 0 : index
    %19 = vector.load %arg8[%c0_17, %c0_18] : memref<1x32xf32, #tpu.memory_space<vmem>>, vector<1x32xf32>
    %20 = vector.broadcast %19 : vector<1x32xf32> to vector<8x32xf32>
    %21 = arith.addf %18, %20 : vector<8x32xf32>
    %cst_19 = arith.constant 1.000000e+00 : f32
    %22 = vector.broadcast %cst_19 : f32 to vector<8x32xf32>
    %23 = arith.addf %22, %12 : vector<8x32xf32>
    %c0_20 = arith.constant 0 : index
    %c0_21 = arith.constant 0 : index
    %24 = vector.load %arg9[%c0_20, %c0_21] : memref<8x32xf32, #tpu.memory_space<vmem>>, vector<8x32xf32>
    tpu.vector_store %arg9[%c0_20, %c0_21], %23 {strides = array<i32>} : memref<8x32xf32, #tpu.memory_space<vmem>>, vector<8x32xf32>,
    %c0_22 = arith.constant 0 : index
    %c0_23 = arith.constant 0 : index
    %25 = vector.load %arg10[%c0_22, %c0_23] : memref<8x32xf32, #tpu.memory_space<vmem>>, vector<8x32xf32>
    tpu.vector_store %arg10[%c0_22, %c0_23], %21 {strides = array<i32>} : memref<8x32xf32, #tpu.memory_space<vmem>>, vector<8x32xf32>,
    %26 = arith.addf %12, %21 : vector<8x32xf32>
    %cst_24 = arith.constant dense<0.000000e+00> : vector<32xf32>
    %27 = vector.multi_reduction <add>, %26, %cst_24 [0] : vector<8x32xf32> to vector<32xf32>
    %28 = vector.shape_cast %27 : vector<32xf32> to vector<1x32xf32>
    %cst_25 = arith.constant 8.000000e+00 : f32
    %29 = vector.broadcast %cst_25 : f32 to vector<1x32xf32>
    %30 = arith.divf %28, %29 : vector<1x32xf32>
    %c0_26 = arith.constant 0 : index
    %c0_27 = arith.constant 0 : index
    %31 = vector.load %arg11[%c0_26, %c0_27] : memref<1x32xf32, #tpu.memory_space<vmem>>, vector<1x32xf32>
    tpu.vector_store %arg11[%c0_26, %c0_27], %30 {strides = array<i32>} : memref<1x32xf32, #tpu.memory_space<vmem>>, vector<1x32xf32>,
    return
  }
  func.func @transform_0(%arg0: i32) -> (i32, i32) {
    %c0_i32 = arith.constant 0 : i32
    %c0_i32_0 = arith.constant 0 : i32
    %c0_i32_1 = arith.constant 0 : i32
    return %c0_i32, %c0_i32_0 : i32, i32
  }
  func.func @transform_1(%arg0: i32) -> (i32, i32) {
    %c0_i32 = arith.constant 0 : i32
    %c0_i32_0 = arith.constant 0 : i32
    %c0_i32_1 = arith.constant 0 : i32
    return %c0_i32, %c0_i32_0 : i32, i32
  }
  func.func @transform_2(%arg0: i32) -> (i32, i32) {
    %c0_i32 = arith.constant 0 : i32
    %c0_i32_0 = arith.constant 0 : i32
    %c0_i32_1 = arith.constant 0 : i32
    return %c0_i32, %c0_i32_0 : i32, i32
  }
  func.func @transform_3(%arg0: i32) -> (i32, i32) {
    %c0_i32 = arith.constant 0 : i32
    %c0_i32_0 = arith.constant 0 : i32
    %c0_i32_1 = arith.constant 0 : i32
    return %c0_i32, %c0_i32_0 : i32, i32
  }
  func.func @transform_4(%arg0: i32) -> (i32, i32) {
    %c0_i32 = arith.constant 0 : i32
    %c0_i32_0 = arith.constant 0 : i32
    %c0_i32_1 = arith.constant 0 : i32
    return %c0_i32, %c0_i32_0 : i32, i32
  }
  func.func @transform_5(%arg0: i32) -> (i32, i32) {
    %c0_i32 = arith.constant 0 : i32
    %c0_i32_0 = arith.constant 0 : i32
    %c0_i32_1 = arith.constant 0 : i32
    return %c0_i32, %c0_i32_0 : i32, i32
  }
  func.func @transform_6(%arg0: i32) -> (i32, i32) {
    %c0_i32 = arith.constant 0 : i32
    %c0_i32_0 = arith.constant 0 : i32
    %c0_i32_1 = arith.constant 0 : i32
    return %c0_i32, %c0_i32_0 : i32, i32
  }
  func.func @transform_7(%arg0: i32) -> (i32, i32) {
    %c0_i32 = arith.constant 0 : i32
    %c0_i32_0 = arith.constant 0 : i32
    %c0_i32_1 = arith.constant 0 : i32
    return %c0_i32, %c0_i32_0 : i32, i32
  }
  func.func @transform_8(%arg0: i32) -> (i32, i32) {
    %c0_i32 = arith.constant 0 : i32
    %c0_i32_0 = arith.constant 0 : i32
    %c0_i32_1 = arith.constant 0 : i32
    return %c0_i32, %c0_i32_0 : i32, i32
  }
  func.func @transform_9(%arg0: i32) -> (i32, i32) {
    %c0_i32 = arith.constant 0 : i32
    %c0_i32_0 = arith.constant 0 : i32
    %c0_i32_1 = arith.constant 0 : i32
    return %c0_i32, %c0_i32_0 : i32, i32
  }
  func.func @transform_10(%arg0: i32) -> (i32, i32) {
    %c0_i32 = arith.constant 0 : i32
    %c0_i32_0 = arith.constant 0 : i32
    %c0_i32_1 = arith.constant 0 : i32
    return %c0_i32, %c0_i32_0 : i32, i32
  }
}

module attributes {stable_mosaic.version = 11 : i64} {
  func.func @_film_modulate_kernel(%arg0: i32, %arg1: memref<8x32x256xf32, #tpu.memory_space<vmem>>, %arg2: memref<8x32x1xf32, #tpu.memory_space<vmem>>, %arg3: memref<8x32x1xf32, #tpu.memory_space<vmem>>, %arg4: memref<8x32x256xf32, #tpu.memory_space<vmem>>) attributes {dimension_semantics = [#tpu.dimension_semantics<parallel>], iteration_bounds = array<i64: 1>, scalar_prefetch = 0 : i64, scratch_operands = 0 : i64, tpu.core_type = #tpu.core_type<tc>, window_params = [{transform_indices = @transform_0, window_bounds = array<i64: 8, 32, 256>}, {pipeline_mode = #tpu.pipeline_mode<synchronous>, transform_indices = @transform_1, window_bounds = array<i64: 8, 32, 1>}, {pipeline_mode = #tpu.pipeline_mode<synchronous>, transform_indices = @transform_2, window_bounds = array<i64: 8, 32, 1>}, {transform_indices = @transform_3, window_bounds = array<i64: 8, 32, 256>}]} {
    %c0 = arith.constant 0 : index
    %c0_0 = arith.constant 0 : index
    %c0_1 = arith.constant 0 : index
    %0 = vector.load %arg1[%c0, %c0_0, %c0_1] : memref<8x32x256xf32, #tpu.memory_space<vmem>>, vector<8x32x256xf32>
    %c0_2 = arith.constant 0 : index
    %c0_3 = arith.constant 0 : index
    %c0_4 = arith.constant 0 : index
    %1 = vector.load %arg2[%c0_2, %c0_3, %c0_4] : memref<8x32x1xf32, #tpu.memory_space<vmem>>, vector<8x32x1xf32>
    %2 = vector.broadcast %1 : vector<8x32x1xf32> to vector<8x32x256xf32>
    %3 = arith.mulf %0, %2 : vector<8x32x256xf32>
    %c0_5 = arith.constant 0 : index
    %c0_6 = arith.constant 0 : index
    %c0_7 = arith.constant 0 : index
    %4 = vector.load %arg3[%c0_5, %c0_6, %c0_7] : memref<8x32x1xf32, #tpu.memory_space<vmem>>, vector<8x32x1xf32>
    %5 = vector.broadcast %4 : vector<8x32x1xf32> to vector<8x32x256xf32>
    %6 = arith.addf %3, %5 : vector<8x32x256xf32>
    %c0_8 = arith.constant 0 : index
    %c0_9 = arith.constant 0 : index
    %c0_10 = arith.constant 0 : index
    %7 = vector.load %arg4[%c0_8, %c0_9, %c0_10] : memref<8x32x256xf32, #tpu.memory_space<vmem>>, vector<8x32x256xf32>
    tpu.vector_store %arg4[%c0_8, %c0_9, %c0_10], %6 {strides = array<i32>} : memref<8x32x256xf32, #tpu.memory_space<vmem>>, vector<8x32x256xf32>,
    return
  }
  func.func @transform_0(%arg0: i32) -> (i32, i32, i32) {
    %c0_i32 = arith.constant 0 : i32
    %c0_i32_0 = arith.constant 0 : i32
    %c0_i32_1 = arith.constant 0 : i32
    return %c0_i32, %c0_i32_0, %arg0 : i32, i32, i32
  }
  func.func @transform_1(%arg0: i32) -> (i32, i32, i32) {
    %c0_i32 = arith.constant 0 : i32
    %c0_i32_0 = arith.constant 0 : i32
    %c0_i32_1 = arith.constant 0 : i32
    %c0_i32_2 = arith.constant 0 : i32
    return %c0_i32, %c0_i32_0, %c0_i32_1 : i32, i32, i32
  }
  func.func @transform_2(%arg0: i32) -> (i32, i32, i32) {
    %c0_i32 = arith.constant 0 : i32
    %c0_i32_0 = arith.constant 0 : i32
    %c0_i32_1 = arith.constant 0 : i32
    %c0_i32_2 = arith.constant 0 : i32
    return %c0_i32, %c0_i32_0, %c0_i32_1 : i32, i32, i32
  }
  func.func @transform_3(%arg0: i32) -> (i32, i32, i32) {
    %c0_i32 = arith.constant 0 : i32
    %c0_i32_0 = arith.constant 0 : i32
    %c0_i32_1 = arith.constant 0 : i32
    return %c0_i32, %c0_i32_0, %arg0 : i32, i32, i32
  }
}

</mosaic_0001>

<llo_original>
// kernel: flim_forward.3
$region0: #{flim_forward.3}
  #allocation0 [shape = 'u32[]', space=smem, size = 0x4, offset = 0x4, fixed_abs, tag = 'smem constant byte address 0x4 - core index']
  #allocation1 [shape = 'u32[144,128]{1,0:T(1,128)}', space=vmem, size = 0x12000, scoped, tag = 'internal scratch']
  %s0 = inlined_call_operand.vmem [shape: f32[8,32,256], index: 0, kind: input, shape index: {}]
  %s1 = inlined_call_operand.vmem [shape: f32[8,32,1], index: 1, kind: output, shape index: {}]
  %s2 = sld [smem:[#allocation0]]
  $region18: #{flim_forward.3} parent=0
    _
  %s4 = ssub.s32 1, %s2
  %s5 = scalar_select 0, %s4, %s2
  // Predicated region
  $region2: #{flim_forward.3} parent=0 // pred_check
    _
  $region3: #{flim_forward.3} parent=0 // pred_check_branch
    %7 = sbr.rel (0) target = $region5
  $region4: #{flim_forward.3} parent=0 // pred_region
    _
  $region5: #{flim_forward.3} parent=0 // pred_fallthru
    _
  %p8 = scmp.eq.s32.totalorder 0, 0
  // Predicated region
  $region6: #{flim_forward.3} parent=0 // pred_check
    %p9 = pneg %p8
  $region7: #{flim_forward.3} parent=0 // pred_check_branch
    %11 = sbr.rel (%p9) target = $region9
  $region8: #{flim_forward.3} parent=0 // pred_region
    %vm12 = vcmask 7168
    %13 = vst.msk [vmem:[%s1] sm:$0xff] %vm12, 0.0
    %14 = vst.msk [vmem:[%s1 + $0x8] sm:$0xff] %vm12, 0.0
    %15 = vst.msk [vmem:[%s1 + $0x10] sm:$0xff] %vm12, 0.0
    %16 = vst.msk [vmem:[%s1 + $0x18] sm:$0xff] %vm12, 0.0
    %17 = vst.msk [vmem:[%s1 + $0x20] sm:$0xff] %vm12, 0.0
    %18 = vst.msk [vmem:[%s1 + $0x28] sm:$0xff] %vm12, 0.0
    %19 = vst.msk [vmem:[%s1 + $0x30] sm:$0xff] %vm12, 0.0
    %20 = vst.msk [vmem:[%s1 + $0x38] sm:$0xff] %vm12, 0.0
    %21 = vst.msk [vmem:[%s1 + $0x40] sm:$0xff] %vm12, 0.0
    %22 = vst.msk [vmem:[%s1 + $0x48] sm:$0xff] %vm12, 0.0
    %23 = vst.msk [vmem:[%s1 + $0x50] sm:$0xff] %vm12, 0.0
    %24 = vst.msk [vmem:[%s1 + $0x58] sm:$0xff] %vm12, 0.0
    %25 = vst.msk [vmem:[%s1 + $0x60] sm:$0xff] %vm12, 0.0
    %26 = vst.msk [vmem:[%s1 + $0x68] sm:$0xff] %vm12, 0.0
    %27 = vst.msk [vmem:[%s1 + $0x70] sm:$0xff] %vm12, 0.0
    %28 = vst.msk [vmem:[%s1 + $0x78] sm:$0xff] %vm12, 0.0
    %29 = vst.msk [vmem:[%s1 + $0x80] sm:$0xff] %vm12, 0.0
    %30 = vst.msk [vmem:[%s1 + $0x88] sm:$0xff] %vm12, 0.0
    %31 = vst.msk [vmem:[%s1 + $0x90] sm:$0xff] %vm12, 0.0
    %32 = vst.msk [vmem:[%s1 + $0x98] sm:$0xff] %vm12, 0.0
    %33 = vst.msk [vmem:[%s1 + $0xa0] sm:$0xff] %vm12, 0.0
    %34 = vst.msk [vmem:[%s1 + $0xa8] sm:$0xff] %vm12, 0.0
    %35 = vst.msk [vmem:[%s1 + $0xb0] sm:$0xff] %vm12, 0.0
    %36 = vst.msk [vmem:[%s1 + $0xb8] sm:$0xff] %vm12, 0.0
    %37 = vst.msk [vmem:[%s1 + $0xc0] sm:$0xff] %vm12, 0.0
    %38 = vst.msk [vmem:[%s1 + $0xc8] sm:$0xff] %vm12, 0.0
    %39 = vst.msk [vmem:[%s1 + $0xd0] sm:$0xff] %vm12, 0.0
    %40 = vst.msk [vmem:[%s1 + $0xd8] sm:$0xff] %vm12, 0.0
    %41 = vst.msk [vmem:[%s1 + $0xe0] sm:$0xff] %vm12, 0.0
    %42 = vst.msk [vmem:[%s1 + $0xe8] sm:$0xff] %vm12, 0.0
    %43 = vst.msk [vmem:[%s1 + $0xf0] sm:$0xff] %vm12, 0.0
    %44 = vst.msk [vmem:[%s1 + $0xf8] sm:$0xff] %vm12, 0.0
  $region9: #{flim_forward.3} parent=0 // pred_fallthru
    _
  %v45 = vld [vmem:[%s1] sm:$0xff]
  %v46 = vld [vmem:[%s1 + $0x8] sm:$0xff]
  %v47 = vld [vmem:[%s1 + $0x10] sm:$0xff]
  %v48 = vld [vmem:[%s1 + $0x18] sm:$0xff]
  %v49 = vld [vmem:[%s1 + $0x20] sm:$0xff]
  %v50 = vld [vmem:[%s1 + $0x28] sm:$0xff]
  %v51 = vld [vmem:[%s1 + $0x30] sm:$0xff]
  %v52 = vld [vmem:[%s1 + $0x38] sm:$0xff]
  %v53 = vld [vmem:[%s1 + $0x40] sm:$0xff]
  %v54 = vld [vmem:[%s1 + $0x48] sm:$0xff]
  %v55 = vld [vmem:[%s1 + $0x50] sm:$0xff]
  %v56 = vld [vmem:[%s1 + $0x58] sm:$0xff]
  %v57 = vld [vmem:[%s1 + $0x60] sm:$0xff]
  %v58 = vld [vmem:[%s1 + $0x68] sm:$0xff]
  %v59 = vld [vmem:[%s1 + $0x70] sm:$0xff]
  %v60 = vld [vmem:[%s1 + $0x78] sm:$0xff]
  %v61 = vld [vmem:[%s1 + $0x80] sm:$0xff]
  %v62 = vld [vmem:[%s1 + $0x88] sm:$0xff]
  %v63 = vld [vmem:[%s1 + $0x90] sm:$0xff]
  %v64 = vld [vmem:[%s1 + $0x98] sm:$0xff]
  %v65 = vld [vmem:[%s1 + $0xa0] sm:$0xff]
  %v66 = vld [vmem:[%s1 + $0xa8] sm:$0xff]
  %v67 = vld [vmem:[%s1 + $0xb0] sm:$0xff]
  %v68 = vld [vmem:[%s1 + $0xb8] sm:$0xff]
  %v69 = vld [vmem:[%s1 + $0xc0] sm:$0xff]
  %v70 = vld [vmem:[%s1 + $0xc8] sm:$0xff]
  %v71 = vld [vmem:[%s1 + $0xd0] sm:$0xff]
  %v72 = vld [vmem:[%s1 + $0xd8] sm:$0xff]
  %v73 = vld [vmem:[%s1 + $0xe0] sm:$0xff]
  %v74 = vld [vmem:[%s1 + $0xe8] sm:$0xff]
  %v75 = vld [vmem:[%s1 + $0xf0] sm:$0xff]
  %v76 = vld [vmem:[%s1 + $0xf8] sm:$0xff]
  %v77 = vld [vmem:[%s0] sm:$0xff]
  %v78 = vld [vmem:[%s0 + $0x8] sm:$0xff]
  %v79 = vld [vmem:[%s0 + $0x10] sm:$0xff]
  %v80 = vld [vmem:[%s0 + $0x18] sm:$0xff]
  %v81 = vld [vmem:[%s0 + $0x20] sm:$0xff]
  %v82 = vld [vmem:[%s0 + $0x28] sm:$0xff]
  %v83 = vld [vmem:[%s0 + $0x30] sm:$0xff]
  %v84 = vld [vmem:[%s0 + $0x38] sm:$0xff]
  %v85 = vld [vmem:[%s0 + $0x40] sm:$0xff]
  %v86 = vld [vmem:[%s0 + $0x48] sm:$0xff]
  %v87 = vld [vmem:[%s0 + $0x50] sm:$0xff]
  %v88 = vld [vmem:[%s0 + $0x58] sm:$0xff]
  %v89 = vld [vmem:[%s0 + $0x60] sm:$0xff]
  %v90 = vld [vmem:[%s0 + $0x68] sm:$0xff]
  %v91 = vld [vmem:[%s0 + $0x70] sm:$0xff]
  %v92 = vld [vmem:[%s0 + $0x78] sm:$0xff]
  %v93 = vld [vmem:[%s0 + $0x80] sm:$0xff]
  %v94 = vld [vmem:[%s0 + $0x88] sm:$0xff]
  %v95 = vld [vmem:[%s0 + $0x90] sm:$0xff]
  %v96 = vld [vmem:[%s0 + $0x98] sm:$0xff]
  %v97 = vld [vmem:[%s0 + $0xa0] sm:$0xff]
  %v98 = vld [vmem:[%s0 + $0xa8] sm:$0xff]
  %v99 = vld [vmem:[%s0 + $0xb0] sm:$0xff]
  %v100 = vld [vmem:[%s0 + $0xb8] sm:$0xff]
  %v101 = vld [vmem:[%s0 + $0xc0] sm:$0xff]
  %v102 = vld [vmem:[%s0 + $0xc8] sm:$0xff]
  %v103 = vld [vmem:[%s0 + $0xd0] sm:$0xff]
  %v104 = vld [vmem:[%s0 + $0xd8] sm:$0xff]
  %v105 = vld [vmem:[%s0 + $0xe0] sm:$0xff]
  %v106 = vld [vmem:[%s0 + $0xe8] sm:$0xff]
  %v107 = vld [vmem:[%s0 + $0xf0] sm:$0xff]
  %v108 = vld [vmem:[%s0 + $0xf8] sm:$0xff]
  %v109 = vld [vmem:[%s0 + $0x100] sm:$0xff]
  %v110 = vld [vmem:[%s0 + $0x108] sm:$0xff]
  %v111 = vld [vmem:[%s0 + $0x110] sm:$0xff]
  %v112 = vld [vmem:[%s0 + $0x118] sm:$0xff]
  %v113 = vld [vmem:[%s0 + $0x120] sm:$0xff]
  %v114 = vld [vmem:[%s0 + $0x128] sm:$0xff]
  %v115 = vld [vmem:[%s0 + $0x130] sm:$0xff]
  %v116 = vld [vmem:[%s0 + $0x138] sm:$0xff]
  %v117 = vld [vmem:[%s0 + $0x140] sm:$0xff]
  %v118 = vld [vmem:[%s0 + $0x148] sm:$0xff]
  %v119 = vld [vmem:[%s0 + $0x150] sm:$0xff]
  %v120 = vld [vmem:[%s0 + $0x158] sm:$0xff]
  %v121 = vld [vmem:[%s0 + $0x160] sm:$0xff]
  %v122 = vld [vmem:[%s0 + $0x168] sm:$0xff]
  %v123 = vld [vmem:[%s0 + $0x170] sm:$0xff]
  %v124 = vld [vmem:[%s0 + $0x178] sm:$0xff]
  %v125 = vld [vmem:[%s0 + $0x180] sm:$0xff]
  %v126 = vld [vmem:[%s0 + $0x188] sm:$0xff]
  %v127 = vld [vmem:[%s0 + $0x190] sm:$0xff]
  %v128 = vld [vmem:[%s0 + $0x198] sm:$0xff]
  %v129 = vld [vmem:[%s0 + $0x1a0] sm:$0xff]
  %v130 = vld [vmem:[%s0 + $0x1a8] sm:$0xff]
  %v131 = vld [vmem:[%s0 + $0x1b0] sm:$0xff]
  %v132 = vld [vmem:[%s0 + $0x1b8] sm:$0xff]
  %v133 = vld [vmem:[%s0 + $0x1c0] sm:$0xff]
  %v134 = vld [vmem:[%s0 + $0x1c8] sm:$0xff]
  %v135 = vld [vmem:[%s0 + $0x1d0] sm:$0xff]
  %v136 = vld [vmem:[%s0 + $0x1d8] sm:$0xff]
  %v137 = vld [vmem:[%s0 + $0x1e0] sm:$0xff]
  %v138 = vld [vmem:[%s0 + $0x1e8] sm:$0xff]
  %v139 = vld [vmem:[%s0 + $0x1f0] sm:$0xff]
  %v140 = vld [vmem:[%s0 + $0x1f8] sm:$0xff]
  %v141 = vadd.f32 %v77, %v78
  %142 = vadd.xlane.f32.xlu0 %v141
  %v143 = vpop.xlane.xlu0 %142
  %v144 = vadd.f32 %v79, %v80
  %145 = vadd.xlane.f32.xlu0 %v144
  %v146 = vpop.xlane.xlu0 %145
  %v147 = vadd.f32 %v81, %v82
  %148 = vadd.xlane.f32.xlu0 %v147
  %v149 = vpop.xlane.xlu0 %148
  %v150 = vadd.f32 %v83, %v84
  %151 = vadd.xlane.f32.xlu0 %v150
  %v152 = vpop.xlane.xlu0 %151
  %v153 = vadd.f32 %v85, %v86
  %154 = vadd.xlane.f32.xlu0 %v153
  %v155 = vpop.xlane.xlu0 %154
  %v156 = vadd.f32 %v87, %v88
  %157 = vadd.xlane.f32.xlu0 %v156
  %v158 = vpop.xlane.xlu0 %157
  %v159 = vadd.f32 %v89, %v90
  %160 = vadd.xlane.f32.xlu0 %v159
  %v161 = vpop.xlane.xlu0 %160
  %v162 = vadd.f32 %v91, %v92
  %163 = vadd.xlane.f32.xlu0 %v162
  %v164 = vpop.xlane.xlu0 %163
  %v165 = vadd.f32 %v93, %v94
  %166 = vadd.xlane.f32.xlu0 %v165
  %v167 = vpop.xlane.xlu0 %166
  %v168 = vadd.f32 %v95, %v96
  %169 = vadd.xlane.f32.xlu0 %v168
  %v170 = vpop.xlane.xlu0 %169
  %v171 = vadd.f32 %v97, %v98
  %172 = vadd.xlane.f32.xlu0 %v171
  %v173 = vpop.xlane.xlu0 %172
  %v174 = vadd.f32 %v99, %v100
  %175 = vadd.xlane.f32.xlu0 %v174
  %v176 = vpop.xlane.xlu0 %175
  %v177 = vadd.f32 %v101, %v102
  %178 = vadd.xlane.f32.xlu0 %v177
  %v179 = vpop.xlane.xlu0 %178
  %v180 = vadd.f32 %v103, %v104
  %181 = vadd.xlane.f32.xlu0 %v180
  %v182 = vpop.xlane.xlu0 %181
  %v183 = vadd.f32 %v105, %v106
  %184 = vadd.xlane.f32.xlu0 %v183
  %v185 = vpop.xlane.xlu0 %184
  %v186 = vadd.f32 %v107, %v108
  %187 = vadd.xlane.f32.xlu0 %v186
  %v188 = vpop.xlane.xlu0 %187
  %v189 = vadd.f32 %v109, %v110
  %190 = vadd.xlane.f32.xlu0 %v189
  %v191 = vpop.xlane.xlu0 %190
  %v192 = vadd.f32 %v111, %v112
  %193 = vadd.xlane.f32.xlu0 %v192
  %v194 = vpop.xlane.xlu0 %193
  %v195 = vadd.f32 %v113, %v114
  %196 = vadd.xlane.f32.xlu0 %v195
  %v197 = vpop.xlane.xlu0 %196
  %v198 = vadd.f32 %v115, %v116
  %199 = vadd.xlane.f32.xlu0 %v198
  %v200 = vpop.xlane.xlu0 %199
  %v201 = vadd.f32 %v117, %v118
  %202 = vadd.xlane.f32.xlu0 %v201
  %v203 = vpop.xlane.xlu0 %202
  %v204 = vadd.f32 %v119, %v120
  %205 = vadd.xlane.f32.xlu0 %v204
  %v206 = vpop.xlane.xlu0 %205
  %v207 = vadd.f32 %v121, %v122
  %208 = vadd.xlane.f32.xlu0 %v207
  %v209 = vpop.xlane.xlu0 %208
  %v210 = vadd.f32 %v123, %v124
  %211 = vadd.xlane.f32.xlu0 %v210
  %v212 = vpop.xlane.xlu0 %211
  %v213 = vadd.f32 %v125, %v126
  %214 = vadd.xlane.f32.xlu0 %v213
  %v215 = vpop.xlane.xlu0 %214
  %v216 = vadd.f32 %v127, %v128
  %217 = vadd.xlane.f32.xlu0 %v216
  %v218 = vpop.xlane.xlu0 %217
  %v219 = vadd.f32 %v129, %v130
  %220 = vadd.xlane.f32.xlu0 %v219
  %v221 = vpop.xlane.xlu0 %220
  %v222 = vadd.f32 %v131, %v132
  %223 = vadd.xlane.f32.xlu0 %v222
  %v224 = vpop.xlane.xlu0 %223
  %v225 = vadd.f32 %v133, %v134
  %226 = vadd.xlane.f32.xlu0 %v225
  %v227 = vpop.xlane.xlu0 %226
  %v228 = vadd.f32 %v135, %v136
  %229 = vadd.xlane.f32.xlu0 %v228
  %v230 = vpop.xlane.xlu0 %229
  %v231 = vadd.f32 %v137, %v138
  %232 = vadd.xlane.f32.xlu0 %v231
  %v233 = vpop.xlane.xlu0 %232
  %v234 = vadd.f32 %v139, %v140
  %235 = vadd.xlane.f32.xlu0 %v234
  %v236 = vpop.xlane.xlu0 %235
  %v237 = vadd.f32 %v45, %v143
  %v238 = vadd.f32 %v46, %v146
  %v239 = vadd.f32 %v47, %v149
  %v240 = vadd.f32 %v48, %v152
  %v241 = vadd.f32 %v49, %v155
  %v242 = vadd.f32 %v50, %v158
  %v243 = vadd.f32 %v51, %v161
  %v244 = vadd.f32 %v52, %v164
  %v245 = vadd.f32 %v53, %v167
  %v246 = vadd.f32 %v54, %v170
  %v247 = vadd.f32 %v55, %v173
  %v248 = vadd.f32 %v56, %v176
  %v249 = vadd.f32 %v57, %v179
  %v250 = vadd.f32 %v58, %v182
  %v251 = vadd.f32 %v59, %v185
  %v252 = vadd.f32 %v60, %v188
  %v253 = vadd.f32 %v61, %v191
  %v254 = vadd.f32 %v62, %v194
  %v255 = vadd.f32 %v63, %v197
  %v256 = vadd.f32 %v64, %v200
  %v257 = vadd.f32 %v65, %v203
  %v258 = vadd.f32 %v66, %v206
  %v259 = vadd.f32 %v67, %v209
  %v260 = vadd.f32 %v68, %v212
  %v261 = vadd.f32 %v69, %v215
  %v262 = vadd.f32 %v70, %v218
  %v263 = vadd.f32 %v71, %v221
  %v264 = vadd.f32 %v72, %v224
  %v265 = vadd.f32 %v73, %v227
  %v266 = vadd.f32 %v74, %v230
  %v267 = vadd.f32 %v75, %v233
  %v268 = vadd.f32 %v76, %v236
  %vm269 = vcmask 7168
  %270 = vst.msk [vmem:[%s1] sm:$0xff] %vm269, %v237
  %271 = vst.msk [vmem:[%s1 + $0x8] sm:$0xff] %vm269, %v238
  %272 = vst.msk [vmem:[%s1 + $0x10] sm:$0xff] %vm269, %v239
  %273 = vst.msk [vmem:[%s1 + $0x18] sm:$0xff] %vm269, %v240
  %274 = vst.msk [vmem:[%s1 + $0x20] sm:$0xff] %vm269, %v241
  %275 = vst.msk [vmem:[%s1 + $0x28] sm:$0xff] %vm269, %v242
  %276 = vst.msk [vmem:[%s1 + $0x30] sm:$0xff] %vm269, %v243
  %277 = vst.msk [vmem:[%s1 + $0x38] sm:$0xff] %vm269, %v244
  %278 = vst.msk [vmem:[%s1 + $0x40] sm:$0xff] %vm269, %v245
  %279 = vst.msk [vmem:[%s1 + $0x48] sm:$0xff] %vm269, %v246
  %280 = vst.msk [vmem:[%s1 + $0x50] sm:$0xff] %vm269, %v247
  %281 = vst.msk [vmem:[%s1 + $0x58] sm:$0xff] %vm269, %v248
  %282 = vst.msk [vmem:[%s1 + $0x60] sm:$0xff] %vm269, %v249
  %283 = vst.msk [vmem:[%s1 + $0x68] sm:$0xff] %vm269, %v250
  %284 = vst.msk [vmem:[%s1 + $0x70] sm:$0xff] %vm269, %v251
  %285 = vst.msk [vmem:[%s1 + $0x78] sm:$0xff] %vm269, %v252
  %286 = vst.msk [vmem:[%s1 + $0x80] sm:$0xff] %vm269, %v253
  %287 = vst.msk [vmem:[%s1 + $0x88] sm:$0xff] %vm269, %v254
  %288 = vst.msk [vmem:[%s1 + $0x90] sm:$0xff] %vm269, %v255
  %289 = vst.msk [vmem:[%s1 + $0x98] sm:$0xff] %vm269, %v256
  %290 = vst.msk [vmem:[%s1 + $0xa0] sm:$0xff] %vm269, %v257
  %291 = vst.msk [vmem:[%s1 + $0xa8] sm:$0xff] %vm269, %v258
  %292 = vst.msk [vmem:[%s1 + $0xb0] sm:$0xff] %vm269, %v259
  %293 = vst.msk [vmem:[%s1 + $0xb8] sm:$0xff] %vm269, %v260
  %294 = vst.msk [vmem:[%s1 + $0xc0] sm:$0xff] %vm269, %v261
  %295 = vst.msk [vmem:[%s1 + $0xc8] sm:$0xff] %vm269, %v262
  %296 = vst.msk [vmem:[%s1 + $0xd0] sm:$0xff] %vm269, %v263
  %297 = vst.msk [vmem:[%s1 + $0xd8] sm:$0xff] %vm269, %v264
  %298 = vst.msk [vmem:[%s1 + $0xe0] sm:$0xff] %vm269, %v265
  %299 = vst.msk [vmem:[%s1 + $0xe8] sm:$0xff] %vm269, %v266
  %300 = vst.msk [vmem:[%s1 + $0xf0] sm:$0xff] %vm269, %v267
  %301 = vst.msk [vmem:[%s1 + $0xf8] sm:$0xff] %vm269, %v268
  // Predicated region
  $region10: #{flim_forward.3} parent=0 // pred_check
    _
  $region11: #{flim_forward.3} parent=0 // pred_check_branch
    %303 = sbr.rel (0) target = $region13
  $region12: #{flim_forward.3} parent=0 // pred_region
    _
  $region13: #{flim_forward.3} parent=0 // pred_fallthru
    _
  // Predicated region
  $region14: #{flim_forward.3} parent=0 // pred_check
    _
  $region15: #{flim_forward.3} parent=0 // pred_check_branch
    %305 = sbr.rel (0) target = $region17
  $region16: #{flim_forward.3} parent=0 // pred_region
    _
  $region17: #{flim_forward.3} parent=0 // pred_fallthru
    _

// kernel: flim_forward.4
$region0: #{flim_forward.4}
  #allocation0 [shape = 'u32[]', space=smem, size = 0x4, offset = 0x4, fixed_abs, tag = 'smem constant byte address 0x4 - core index']
  #allocation1 [shape = 'u32[144,128]{1,0:T(1,128)}', space=vmem, size = 0x12000, scoped, tag = 'internal scratch']
  %s0 = inlined_call_operand.vmem [shape: f32[8,32], index: 0, kind: input, shape index: {}]
  %s1 = inlined_call_operand.vmem [shape: f32[1,32], index: 1, kind: input, shape index: {}]
  %s2 = inlined_call_operand.vmem [shape: f32[32,32], index: 2, kind: input, shape index: {}]
  %s3 = inlined_call_operand.vmem [shape: f32[32,32], index: 3, kind: input, shape index: {}]
  %s4 = inlined_call_operand.vmem [shape: f32[32,32], index: 4, kind: input, shape index: {}]
  %s5 = inlined_call_operand.vmem [shape: f32[32,32], index: 5, kind: input, shape index: {}]
  %s6 = inlined_call_operand.vmem [shape: f32[1,32], index: 6, kind: input, shape index: {}]
  %s7 = inlined_call_operand.vmem [shape: f32[1,32], index: 7, kind: input, shape index: {}]
  %s8 = inlined_call_operand.vmem [shape: f32[8,32], index: 8, kind: output, shape index: {0}]
  %s9 = inlined_call_operand.vmem [shape: f32[8,32], index: 9, kind: output, shape index: {1}]
  %s10 = inlined_call_operand.hbm [shape: f32[1,32], index: 10, kind: output, shape index: {2}]
  %11 = xla_tuple %s8, %s9, %s10
  %s12 = sld [smem:[#allocation0]]
  $region58: #{flim_forward.4} parent=0
    _
  %s14 = ssub.s32 1, %s12
  %s15 = scalar_select 0, %s14, %s12
  $region1: #{flim_forward.4} parent=0
    #allocation2 [shape = 'u8[512]{0}', space=vmem, size = 0x400, scoped, tag = 'output window, operand 2, single buffered']
    #allocation3 [shape = 's32[1]{0}', space=sflag, size = 0x4, scoped, tag = 'scoped memory for flim_forward.4']
    %16 = vsyncpa [#allocation3], 0
    // Predicated region
    $region2: #{flim_forward.4} parent=1 // pred_check
      _
    $region3: #{flim_forward.4} parent=1 // pred_check_branch
      %18 = sbr.rel (0) target = $region5
    $region4: #{flim_forward.4} parent=1 // pred_region
      _
    $region5: #{flim_forward.4} parent=1 // pred_fallthru
      _
    // Predicated region
    $region6: #{flim_forward.4} parent=1 // pred_check
      _
    $region7: #{flim_forward.4} parent=1 // pred_check_branch
      %20 = sbr.rel (0) target = $region9
    $region8: #{flim_forward.4} parent=1 // pred_region
      _
    $region9: #{flim_forward.4} parent=1 // pred_fallthru
      _
    // Predicated region
    $region10: #{flim_forward.4} parent=1 // pred_check
      _
    $region11: #{flim_forward.4} parent=1 // pred_check_branch
      %22 = sbr.rel (0) target = $region13
    $region12: #{flim_forward.4} parent=1 // pred_region
      _
    $region13: #{flim_forward.4} parent=1 // pred_fallthru
      _
    // Predicated region
    $region14: #{flim_forward.4} parent=1 // pred_check
      _
    $region15: #{flim_forward.4} parent=1 // pred_check_branch
      %24 = sbr.rel (0) target = $region17
    $region16: #{flim_forward.4} parent=1 // pred_region
      _
    $region17: #{flim_forward.4} parent=1 // pred_fallthru
      _
    // Predicated region
    $region18: #{flim_forward.4} parent=1 // pred_check
      _
    $region19: #{flim_forward.4} parent=1 // pred_check_branch
      %26 = sbr.rel (0) target = $region21
    $region20: #{flim_forward.4} parent=1 // pred_region
      _
    $region21: #{flim_forward.4} parent=1 // pred_fallthru
      _
    // Predicated region
    $region22: #{flim_forward.4} parent=1 // pred_check
      _
    $region23: #{flim_forward.4} parent=1 // pred_check_branch
      %28 = sbr.rel (0) target = $region25
    $region24: #{flim_forward.4} parent=1 // pred_region
      _
    $region25: #{flim_forward.4} parent=1 // pred_fallthru
      _
    // Predicated region
    $region26: #{flim_forward.4} parent=1 // pred_check
      _
    $region27: #{flim_forward.4} parent=1 // pred_check_branch
      %30 = sbr.rel (0) target = $region29
    $region28: #{flim_forward.4} parent=1 // pred_region
      _
    $region29: #{flim_forward.4} parent=1 // pred_fallthru
      _
    // Predicated region
    $region30: #{flim_forward.4} parent=1 // pred_check
      _
    $region31: #{flim_forward.4} parent=1 // pred_check_branch
      %32 = sbr.rel (0) target = $region33
    $region32: #{flim_forward.4} parent=1 // pred_region
      _
    $region33: #{flim_forward.4} parent=1 // pred_fallthru
      _
    %v33 = vld [vmem:[%s0] sm:$0xff]
    %v34 = vmul.f32 %v33, 0.00390625
    %v35 = vld [vmem:[%s1] sm:$0x1]
    %v36 = vld [vmem:[%s2] sm:$0xff]
    %v37 = vld [vmem:[%s2 + $0x8] sm:$0xff]
    %v38 = vld [vmem:[%s2 + $0x10] sm:$0xff]
    %v39 = vld [vmem:[%s2 + $0x18] sm:$0xff]
    %v40 = vld [vmem:[%s3] sm:$0xff]
    %v41 = vld [vmem:[%s3 + $0x8] sm:$0xff]
    %v42 = vld [vmem:[%s3 + $0x10] sm:$0xff]
    %v43 = vld [vmem:[%s3 + $0x18] sm:$0xff]
    %vm44 = vcmask 261120
    %v46 = vsel %vm44, %v35, 0
    %48 = vmatprep.subr.mxu0 0.0
    %49 = vmatpush1.msra.mxu0 0.0
    %50 = vmatprep.subr.mxu0 0.0
    %51 = vmatpush1.msra.mxu0 0.0
    %52 = vmatprep.subr.mxu0 0.0
    %53 = vmatpush1.msra.mxu0 0.0
    %54 = vmatprep.subr.mxu0 0.0
    %55 = vmatpush1.msra.mxu0 0.0
    %56 = vmatprep.subr.mxu0 0.0
    %57 = vmatpush1.msra.mxu0 0.0
    %58 = vmatprep.subr.mxu0 0.0
    %59 = vmatpush1.msra.mxu0 0.0
    %60 = vmatprep.subr.mxu0 0.0
    %61 = vmatpush1.msra.mxu0 0.0
    %62 = vmatprep.subr.mxu0 0.0
    %63 = vmatpush1.msra.mxu0 0.0
    %64 = vmatprep.subr.mxu0 0.0
    %65 = vmatpush1.msra.mxu0 0.0
    %66 = vmatprep.subr.mxu0 0.0
    %67 = vmatpush1.msra.mxu0 0.0
    %68 = vmatprep.subr.mxu0 0.0
    %69 = vmatpush1.msra.mxu0 0.0
    %70 = vmatprep.subr.mxu0 0.0
    %71 = vmatpush1.msra.mxu0 0.0
    %72 = vmatprep.subr.mxu0 0.0
    %73 = vmatpush1.msra.mxu0 %v43
    %74 = vmatprep.subr.mxu0 0.0
    %75 = vmatpush1.msra.mxu0 %v42
    %76 = vmatprep.subr.mxu0 0.0
    %77 = vmatpush1.msra.mxu0 %v41
    %78 = vmatprep.subr.mxu0 0.0
    %79 = vmatpush1.msra.mxu0 %v40
    %80 = vmatprep.subr.mxu0 0.0
    %81 = vmatpush2.msra.mxu0 0.0
    %82 = vmatprep.subr.mxu0 0.0
    %83 = vmatpush2.msra.mxu0 0.0
    %84 = vmatprep.subr.mxu0 0.0
    %85 = vmatpush2.msra.mxu0 0.0
    %86 = vmatprep.subr.mxu0 0.0
    %87 = vmatpush2.msra.mxu0 0.0
    %88 = vmatprep.subr.mxu0 0.0
    %89 = vmatpush2.msra.mxu0 0.0
    %90 = vmatprep.subr.mxu0 0.0
    %91 = vmatpush2.msra.mxu0 0.0
    %92 = vmatprep.subr.mxu0 0.0
    %93 = vmatpush2.msra.mxu0 0.0
    %94 = vmatprep.subr.mxu0 0.0
    %95 = vmatpush2.msra.mxu0 0.0
    %96 = vmatprep.subr.mxu0 0.0
    %97 = vmatpush2.msra.mxu0 0.0
    %98 = vmatprep.subr.mxu0 0.0
    %99 = vmatpush2.msra.mxu0 0.0
    %100 = vmatprep.subr.mxu0 0.0
    %101 = vmatpush2.msra.mxu0 0.0
    %102 = vmatprep.subr.mxu0 0.0
    %103 = vmatpush2.msra.mxu0 0.0
    %104 = vmatprep.subr.mxu0 0.0
    %105 = vmatpush2.msra.mxu0 0.0
    %106 = vmatprep.subr.mxu0 0.0
    %107 = vmatpush2.msra.mxu0 0.0
    %108 = vmatprep.subr.mxu0 0.0
    %109 = vmatpush2.msra.mxu0 0.0
    %110 = vmatprep.subr.mxu0 0.0
    %111 = vmatpush2.msra.mxu0 0.0
    %112 = vmatprep.mubr.f32.mxu0 0.0
    %113 = vmatmul.mubr.f32.gmra.mxu0 %v46
    %v114 = vpop.f32.mrf.mxu0
    %v115 = vadd.f32 0.0, %v114
    %v116 = vpop.f32.mrf.mxu0
    %117 = vdwg.mxu0
    %v118 = vlaneseq
    %v119 = vshrl.u32 %v118, 7
    %v120 = vsub.s32 0, %v119
    %v121 = vrot.slane %v115, %v120
    %v123 = vsel %vm44, %v34, 0
    %125 = vmatprep.subr.mxu0 0.0
    %126 = vmatpush1.msra.mxu0 0.0
    %127 = vmatprep.subr.mxu0 0.0
    %128 = vmatpush1.msra.mxu0 0.0
    %129 = vmatprep.subr.mxu0 0.0
    %130 = vmatpush1.msra.mxu0 0.0
    %131 = vmatprep.subr.mxu0 0.0
    %132 = vmatpush1.msra.mxu0 0.0
    %133 = vmatprep.subr.mxu0 0.0
    %134 = vmatpush1.msra.mxu0 0.0
    %135 = vmatprep.subr.mxu0 0.0
    %136 = vmatpush1.msra.mxu0 0.0
    %137 = vmatprep.subr.mxu0 0.0
    %138 = vmatpush1.msra.mxu0 0.0
    %139 = vmatprep.subr.mxu0 0.0
    %140 = vmatpush1.msra.mxu0 0.0
    %141 = vmatprep.subr.mxu0 0.0
    %142 = vmatpush1.msra.mxu0 0.0
    %143 = vmatprep.subr.mxu0 0.0
    %144 = vmatpush1.msra.mxu0 0.0
    %145 = vmatprep.subr.mxu0 0.0
    %146 = vmatpush1.msra.mxu0 0.0
    %147 = vmatprep.subr.mxu0 0.0
    %148 = vmatpush1.msra.mxu0 0.0
    %149 = vmatprep.subr.mxu0 0.0
    %150 = vmatpush1.msra.mxu0 %v39
    %151 = vmatprep.subr.mxu0 0.0
    %152 = vmatpush1.msra.mxu0 %v38
    %153 = vmatprep.subr.mxu0 0.0
    %154 = vmatpush1.msra.mxu0 %v37
    %155 = vmatprep.subr.mxu0 0.0
    %156 = vmatpush1.msra.mxu0 %v36
    %157 = vmatprep.subr.mxu0 0.0
    %158 = vmatpush2.msra.mxu0 0.0
    %159 = vmatprep.subr.mxu0 0.0
    %160 = vmatpush2.msra.mxu0 0.0
    %161 = vmatprep.subr.mxu0 0.0
    %162 = vmatpush2.msra.mxu0 0.0
    %163 = vmatprep.subr.mxu0 0.0
    %164 = vmatpush2.msra.mxu0 0.0
    %165 = vmatprep.subr.mxu0 0.0
    %166 = vmatpush2.msra.mxu0 0.0
    %167 = vmatprep.subr.mxu0 0.0
    %168 = vmatpush2.msra.mxu0 0.0
    %169 = vmatprep.subr.mxu0 0.0
    %170 = vmatpush2.msra.mxu0 0.0
    %171 = vmatprep.subr.mxu0 0.0
    %172 = vmatpush2.msra.mxu0 0.0
    %173 = vmatprep.subr.mxu0 0.0
    %174 = vmatpush2.msra.mxu0 0.0
    %175 = vmatprep.subr.mxu0 0.0
    %176 = vmatpush2.msra.mxu0 0.0
    %177 = vmatprep.subr.mxu0 0.0
    %178 = vmatpush2.msra.mxu0 0.0
    %179 = vmatprep.subr.mxu0 0.0
    %180 = vmatpush2.msra.mxu0 0.0
    %181 = vmatprep.subr.mxu0 0.0
    %182 = vmatpush2.msra.mxu0 0.0
    %183 = vmatprep.subr.mxu0 0.0
    %184 = vmatpush2.msra.mxu0 0.0
    %185 = vmatprep.subr.mxu0 0.0
    %186 = vmatpush2.msra.mxu0 0.0
    %187 = vmatprep.subr.mxu0 0.0
    %188 = vmatpush2.msra.mxu0 0.0
    %189 = vmatprep.mubr.f32.mxu0 0.0
    %190 = vmatmul.mubr.f32.gmra.mxu0 %v123
    %v191 = vpop.f32.mrf.mxu0
    %v192 = vadd.f32 %v121, %v191
    %v193 = vpop.f32.mrf.mxu0
    %194 = vdwg.mxu0
    %v195 = vld [vmem:[%s6] sm:$0x1]
    %v197 = vlaneseq
    %v198 = vshrl.u32 %v197, 7
    %v199 = vsub.s32 0, %v198
    %v200 = vrot.slane %v195, %v199
    %v202 = vadd.f32 %v192, %v200
    %v203 = vld [vmem:[%s4] sm:$0xff]
    %v204 = vld [vmem:[%s4 + $0x8] sm:$0xff]
    %v205 = vld [vmem:[%s4 + $0x10] sm:$0xff]
    %v206 = vld [vmem:[%s4 + $0x18] sm:$0xff]
    %v207 = vld [vmem:[%s5] sm:$0xff]
    %v208 = vld [vmem:[%s5 + $0x8] sm:$0xff]
    %v209 = vld [vmem:[%s5 + $0x10] sm:$0xff]
    %v210 = vld [vmem:[%s5 + $0x18] sm:$0xff]
    %211 = vmatprep.subr.mxu0 0.0
    %212 = vmatpush1.msra.mxu0 0.0
    %213 = vmatprep.subr.mxu0 0.0
    %214 = vmatpush1.msra.mxu0 0.0
    %215 = vmatprep.subr.mxu0 0.0
    %216 = vmatpush1.msra.mxu0 0.0
    %217 = vmatprep.subr.mxu0 0.0
    %218 = vmatpush1.msra.mxu0 0.0
    %219 = vmatprep.subr.mxu0 0.0
    %220 = vmatpush1.msra.mxu0 0.0
    %221 = vmatprep.subr.mxu0 0.0
    %222 = vmatpush1.msra.mxu0 0.0
    %223 = vmatprep.subr.mxu0 0.0
    %224 = vmatpush1.msra.mxu0 0.0
    %225 = vmatprep.subr.mxu0 0.0
    %226 = vmatpush1.msra.mxu0 0.0
    %227 = vmatprep.subr.mxu0 0.0
    %228 = vmatpush1.msra.mxu0 0.0
    %229 = vmatprep.subr.mxu0 0.0
    %230 = vmatpush1.msra.mxu0 0.0
    %231 = vmatprep.subr.mxu0 0.0
    %232 = vmatpush1.msra.mxu0 0.0
    %233 = vmatprep.subr.mxu0 0.0
    %234 = vmatpush1.msra.mxu0 0.0
    %235 = vmatprep.subr.mxu0 0.0
    %236 = vmatpush1.msra.mxu0 %v210
    %237 = vmatprep.subr.mxu0 0.0
    %238 = vmatpush1.msra.mxu0 %v209
    %239 = vmatprep.subr.mxu0 0.0
    %240 = vmatpush1.msra.mxu0 %v208
    %241 = vmatprep.subr.mxu0 0.0
    %242 = vmatpush1.msra.mxu0 %v207
    %243 = vmatprep.subr.mxu0 0.0
    %244 = vmatpush2.msra.mxu0 0.0
    %245 = vmatprep.subr.mxu0 0.0
    %246 = vmatpush2.msra.mxu0 0.0
    %247 = vmatprep.subr.mxu0 0.0
    %248 = vmatpush2.msra.mxu0 0.0
    %249 = vmatprep.subr.mxu0 0.0
    %250 = vmatpush2.msra.mxu0 0.0
    %251 = vmatprep.subr.mxu0 0.0
    %252 = vmatpush2.msra.mxu0 0.0
    %253 = vmatprep.subr.mxu0 0.0
    %254 = vmatpush2.msra.mxu0 0.0
    %255 = vmatprep.subr.mxu0 0.0
    %256 = vmatpush2.msra.mxu0 0.0
    %257 = vmatprep.subr.mxu0 0.0
    %258 = vmatpush2.msra.mxu0 0.0
    %259 = vmatprep.subr.mxu0 0.0
    %260 = vmatpush2.msra.mxu0 0.0
    %261 = vmatprep.subr.mxu0 0.0
    %262 = vmatpush2.msra.mxu0 0.0
    %263 = vmatprep.subr.mxu0 0.0
    %264 = vmatpush2.msra.mxu0 0.0
    %265 = vmatprep.subr.mxu0 0.0
    %266 = vmatpush2.msra.mxu0 0.0
    %267 = vmatprep.subr.mxu0 0.0
    %268 = vmatpush2.msra.mxu0 0.0
    %269 = vmatprep.subr.mxu0 0.0
    %270 = vmatpush2.msra.mxu0 0.0
    %271 = vmatprep.subr.mxu0 0.0
    %272 = vmatpush2.msra.mxu0 0.0
    %273 = vmatprep.subr.mxu0 0.0
    %274 = vmatpush2.msra.mxu0 0.0
    %275 = vmatprep.mubr.f32.mxu0 0.0
    %276 = vmatmul.mubr.f32.gmra.mxu0 %v46
    %v277 = vpop.f32.mrf.mxu0
    %v278 = vadd.f32 0.0, %v277
    %v279 = vpop.f32.mrf.mxu0
    %280 = vdwg.mxu0
    %v281 = vlaneseq
    %v282 = vshrl.u32 %v281, 7
    %v283 = vsub.s32 0, %v282
    %v284 = vrot.slane %v278, %v283
    %285 = vmatprep.subr.mxu0 0.0
    %286 = vmatpush1.msra.mxu0 0.0
    %287 = vmatprep.subr.mxu0 0.0
    %288 = vmatpush1.msra.mxu0 0.0
    %289 = vmatprep.subr.mxu0 0.0
    %290 = vmatpush1.msra.mxu0 0.0
    %291 = vmatprep.subr.mxu0 0.0
    %292 = vmatpush1.msra.mxu0 0.0
    %293 = vmatprep.subr.mxu0 0.0
    %294 = vmatpush1.msra.mxu0 0.0
    %295 = vmatprep.subr.mxu0 0.0
    %296 = vmatpush1.msra.mxu0 0.0
    %297 = vmatprep.subr.mxu0 0.0
    %298 = vmatpush1.msra.mxu0 0.0
    %299 = vmatprep.subr.mxu0 0.0
    %300 = vmatpush1.msra.mxu0 0.0
    %301 = vmatprep.subr.mxu0 0.0
    %302 = vmatpush1.msra.mxu0 0.0
    %303 = vmatprep.subr.mxu0 0.0
    %304 = vmatpush1.msra.mxu0 0.0
    %305 = vmatprep.subr.mxu0 0.0
    %306 = vmatpush1.msra.mxu0 0.0
    %307 = vmatprep.subr.mxu0 0.0
    %308 = vmatpush1.msra.mxu0 0.0
    %309 = vmatprep.subr.mxu0 0.0
    %310 = vmatpush1.msra.mxu0 %v206
    %311 = vmatprep.subr.mxu0 0.0
    %312 = vmatpush1.msra.mxu0 %v205
    %313 = vmatprep.subr.mxu0 0.0
    %314 = vmatpush1.msra.mxu0 %v204
    %315 = vmatprep.subr.mxu0 0.0
    %316 = vmatpush1.msra.mxu0 %v203
    %317 = vmatprep.subr.mxu0 0.0
    %318 = vmatpush2.msra.mxu0 0.0
    %319 = vmatprep.subr.mxu0 0.0
    %320 = vmatpush2.msra.mxu0 0.0
    %321 = vmatprep.subr.mxu0 0.0
    %322 = vmatpush2.msra.mxu0 0.0
    %323 = vmatprep.subr.mxu0 0.0
    %324 = vmatpush2.msra.mxu0 0.0
    %325 = vmatprep.subr.mxu0 0.0
    %326 = vmatpush2.msra.mxu0 0.0
    %327 = vmatprep.subr.mxu0 0.0
    %328 = vmatpush2.msra.mxu0 0.0
    %329 = vmatprep.subr.mxu0 0.0
    %330 = vmatpush2.msra.mxu0 0.0
    %331 = vmatprep.subr.mxu0 0.0
    %332 = vmatpush2.msra.mxu0 0.0
    %333 = vmatprep.subr.mxu0 0.0
    %334 = vmatpush2.msra.mxu0 0.0
    %335 = vmatprep.subr.mxu0 0.0
    %336 = vmatpush2.msra.mxu0 0.0
    %337 = vmatprep.subr.mxu0 0.0
    %338 = vmatpush2.msra.mxu0 0.0
    %339 = vmatprep.subr.mxu0 0.0
    %340 = vmatpush2.msra.mxu0 0.0
    %341 = vmatprep.subr.mxu0 0.0
    %342 = vmatpush2.msra.mxu0 0.0
    %343 = vmatprep.subr.mxu0 0.0
    %344 = vmatpush2.msra.mxu0 0.0
    %345 = vmatprep.subr.mxu0 0.0
    %346 = vmatpush2.msra.mxu0 0.0
    %347 = vmatprep.subr.mxu0 0.0
    %348 = vmatpush2.msra.mxu0 0.0
    %349 = vmatprep.mubr.f32.mxu0 0.0
    %350 = vmatmul.mubr.f32.gmra.mxu0 %v123
    %v351 = vpop.f32.mrf.mxu0
    %v352 = vadd.f32 %v284, %v351
    %v353 = vpop.f32.mrf.mxu0
    %354 = vdwg.mxu0
    %v355 = vld [vmem:[%s7] sm:$0x1]
    %v357 = vlaneseq
    %v358 = vshrl.u32 %v357, 7
    %v359 = vsub.s32 0, %v358
    %v360 = vrot.slane %v355, %v359
    %v362 = vadd.f32 %v352, %v360
    %v363 = vadd.f32 %v202, 1.0
    %364 = vst.msk [vmem:[%s8] sm:$0xff] %vm44, %v363
    %365 = vst.msk [vmem:[%s9] sm:$0xff] %vm44, %v362
    %v366 = vadd.f32 %v202, %v362
    %v367 = vsel %vm44, %v366, 0.0
    %v368 = vrot.slane %v367, 4
    %v369 = vadd.f32 %v367, %v368
    %v370 = vrot.slane %v369, 2
    %v371 = vadd.f32 %v369, %v370
    %v372 = vrot.slane %v371, 1
    %v373 = vadd.f32 %v371, %v372
    %v374 = vrcp.pop 8.0
    %v375 = vmul.f32 %v373, %v374
    %vm376 = vcmask 253952
    %377 = vst.msk [vmem:[#allocation2] sm:$0x1] %vm376, %v375
    // Predicated region
    $region34: #{flim_forward.4} parent=1 // pred_check
      _
    $region35: #{flim_forward.4} parent=1 // pred_check_branch
      %379 = sbr.rel (0) target = $region37
    $region36: #{flim_forward.4} parent=1 // pred_region
      _
    $region37: #{flim_forward.4} parent=1 // pred_fallthru
      _
    // Predicated region
    $region38: #{flim_forward.4} parent=1 // pred_check
      _
    $region39: #{flim_forward.4} parent=1 // pred_check_branch
      %381 = sbr.rel (0) target = $region41
    $region40: #{flim_forward.4} parent=1 // pred_region
      _
    $region41: #{flim_forward.4} parent=1 // pred_fallthru
      _
    // Predicated region
    $region42: #{flim_forward.4} parent=1 // pred_check
      _
    $region43: #{flim_forward.4} parent=1 // pred_check_branch
      %383 = sbr.rel (0) target = $region45
    $region44: #{flim_forward.4} parent=1 // pred_region
      %s385 = ssub.s32 16, 16
      %386 = vsyncadd [#allocation3], %s385
      %s388 = sshll.u32 [#allocation2], 4
      %s389 = int_to_ptr.vmem [resolvable:$true] %s388
      %391 = dma.vmem_to_hbm [thread:$0]  %s389, 16, %s10, [#allocation3]
    $region45: #{flim_forward.4} parent=1 // pred_fallthru
      _
    // Predicated region
    $region46: #{flim_forward.4} parent=1 // pred_check
      _
    $region47: #{flim_forward.4} parent=1 // pred_check_branch
      %393 = sbr.rel (0) target = $region49
    $region48: #{flim_forward.4} parent=1 // pred_region
      _
    $region49: #{flim_forward.4} parent=1 // pred_fallthru
      _
    // Predicated region
    $region50: #{flim_forward.4} parent=1 // pred_check
      _
    $region51: #{flim_forward.4} parent=1 // pred_check_branch
      %395 = sbr.rel (0) target = $region53
    $region52: #{flim_forward.4} parent=1 // pred_region
      _
    $region53: #{flim_forward.4} parent=1 // pred_fallthru
      _
    // Predicated region
    $region54: #{flim_forward.4} parent=1 // pred_check
      _
    $region55: #{flim_forward.4} parent=1 // pred_check_branch
      %397 = sbr.rel (0) target = $region57
    $region56: #{flim_forward.4} parent=1 // pred_region
      %398 = dma.done [#allocation3], 16
    $region57: #{flim_forward.4} parent=1 // pred_fallthru
      _
    %399 = vsyncpa [#allocation3], 1

// kernel: flim_forward.5
$region0: #{flim_forward.5}
  #allocation0 [shape = 'u32[]', space=smem, size = 0x4, offset = 0x4, fixed_abs, tag = 'smem constant byte address 0x4 - core index']
  #allocation1 [shape = 'u32[144,128]{1,0:T(1,128)}', space=vmem, size = 0x12000, scoped, tag = 'internal scratch']
  %s0 = inlined_call_operand.vmem [shape: f32[8,32,256], index: 0, kind: input, shape index: {}]
  %s1 = inlined_call_operand.vmem [shape: f32[8,32,1], index: 1, kind: input, shape index: {}]
  %s2 = inlined_call_operand.vmem [shape: f32[8,32,1], index: 2, kind: input, shape index: {}]
  %s3 = inlined_call_operand.vmem [shape: f32[8,32,256], index: 3, kind: output, shape index: {}]
  %s4 = sld [smem:[#allocation0]]
  $region22: #{flim_forward.5} parent=0
    _
  %s6 = ssub.s32 1, %s4
  %s7 = scalar_select 0, %s6, %s4
  // Predicated region
  $region2: #{flim_forward.5} parent=0 // pred_check
    _
  $region3: #{flim_forward.5} parent=0 // pred_check_branch
    %9 = sbr.rel (0) target = $region5
  $region4: #{flim_forward.5} parent=0 // pred_region
    _
  $region5: #{flim_forward.5} parent=0 // pred_fallthru
    _
  // Predicated region
  $region6: #{flim_forward.5} parent=0 // pred_check
    _
  $region7: #{flim_forward.5} parent=0 // pred_check_branch
    %11 = sbr.rel (0) target = $region9
  $region8: #{flim_forward.5} parent=0 // pred_region
    _
  $region9: #{flim_forward.5} parent=0 // pred_fallthru
    _
  // Predicated region
  $region10: #{flim_forward.5} parent=0 // pred_check
    _
  $region11: #{flim_forward.5} parent=0 // pred_check_branch
    %13 = sbr.rel (0) target = $region13
  $region12: #{flim_forward.5} parent=0 // pred_region
    _
  $region13: #{flim_forward.5} parent=0 // pred_fallthru
    _
  %v14 = vld [vmem:[%s0] sm:$0xff]
  %v15 = vld [vmem:[%s0 + $0x8] sm:$0xff]
  %v16 = vld [vmem:[%s0 + $0x10] sm:$0xff]
  %v17 = vld [vmem:[%s0 + $0x18] sm:$0xff]
  %v18 = vld [vmem:[%s0 + $0x20] sm:$0xff]
  %v19 = vld [vmem:[%s0 + $0x28] sm:$0xff]
  %v20 = vld [vmem:[%s0 + $0x30] sm:$0xff]
  %v21 = vld [vmem:[%s0 + $0x38] sm:$0xff]
  %v22 = vld [vmem:[%s0 + $0x40] sm:$0xff]
  %v23 = vld [vmem:[%s0 + $0x48] sm:$0xff]
  %v24 = vld [vmem:[%s0 + $0x50] sm:$0xff]
  %v25 = vld [vmem:[%s0 + $0x58] sm:$0xff]
  %v26 = vld [vmem:[%s0 + $0x60] sm:$0xff]
  %v27 = vld [vmem:[%s0 + $0x68] sm:$0xff]
  %v28 = vld [vmem:[%s0 + $0x70] sm:$0xff]
  %v29 = vld [vmem:[%s0 + $0x78] sm:$0xff]
  %v30 = vld [vmem:[%s0 + $0x80] sm:$0xff]
  %v31 = vld [vmem:[%s0 + $0x88] sm:$0xff]
  %v32 = vld [vmem:[%s0 + $0x90] sm:$0xff]
  %v33 = vld [vmem:[%s0 + $0x98] sm:$0xff]
  %v34 = vld [vmem:[%s0 + $0xa0] sm:$0xff]
  %v35 = vld [vmem:[%s0 + $0xa8] sm:$0xff]
  %v36 = vld [vmem:[%s0 + $0xb0] sm:$0xff]
  %v37 = vld [vmem:[%s0 + $0xb8] sm:$0xff]
  %v38 = vld [vmem:[%s0 + $0xc0] sm:$0xff]
  %v39 = vld [vmem:[%s0 + $0xc8] sm:$0xff]
  %v40 = vld [vmem:[%s0 + $0xd0] sm:$0xff]
  %v41 = vld [vmem:[%s0 + $0xd8] sm:$0xff]
  %v42 = vld [vmem:[%s0 + $0xe0] sm:$0xff]
  %v43 = vld [vmem:[%s0 + $0xe8] sm:$0xff]
  %v44 = vld [vmem:[%s0 + $0xf0] sm:$0xff]
  %v45 = vld [vmem:[%s0 + $0xf8] sm:$0xff]
  %v46 = vld [vmem:[%s0 + $0x100] sm:$0xff]
  %v47 = vld [vmem:[%s0 + $0x108] sm:$0xff]
  %v48 = vld [vmem:[%s0 + $0x110] sm:$0xff]
  %v49 = vld [vmem:[%s0 + $0x118] sm:$0xff]
  %v50 = vld [vmem:[%s0 + $0x120] sm:$0xff]
  %v51 = vld [vmem:[%s0 + $0x128] sm:$0xff]
  %v52 = vld [vmem:[%s0 + $0x130] sm:$0xff]
  %v53 = vld [vmem:[%s0 + $0x138] sm:$0xff]
  %v54 = vld [vmem:[%s0 + $0x140] sm:$0xff]
  %v55 = vld [vmem:[%s0 + $0x148] sm:$0xff]
  %v56 = vld [vmem:[%s0 + $0x150] sm:$0xff]
  %v57 = vld [vmem:[%s0 + $0x158] sm:$0xff]
  %v58 = vld [vmem:[%s0 + $0x160] sm:$0xff]
  %v59 = vld [vmem:[%s0 + $0x168] sm:$0xff]
  %v60 = vld [vmem:[%s0 + $0x170] sm:$0xff]
  %v61 = vld [vmem:[%s0 + $0x178] sm:$0xff]
  %v62 = vld [vmem:[%s0 + $0x180] sm:$0xff]
  %v63 = vld [vmem:[%s0 + $0x188] sm:$0xff]
  %v64 = vld [vmem:[%s0 + $0x190] sm:$0xff]
  %v65 = vld [vmem:[%s0 + $0x198] sm:$0xff]
  %v66 = vld [vmem:[%s0 + $0x1a0] sm:$0xff]
  %v67 = vld [vmem:[%s0 + $0x1a8] sm:$0xff]
  %v68 = vld [vmem:[%s0 + $0x1b0] sm:$0xff]
  %v69 = vld [vmem:[%s0 + $0x1b8] sm:$0xff]
  %v70 = vld [vmem:[%s0 + $0x1c0] sm:$0xff]
  %v71 = vld [vmem:[%s0 + $0x1c8] sm:$0xff]
  %v72 = vld [vmem:[%s0 + $0x1d0] sm:$0xff]
  %v73 = vld [vmem:[%s0 + $0x1d8] sm:$0xff]
  %v74 = vld [vmem:[%s0 + $0x1e0] sm:$0xff]
  %v75 = vld [vmem:[%s0 + $0x1e8] sm:$0xff]
  %v76 = vld [vmem:[%s0 + $0x1f0] sm:$0xff]
  %v77 = vld [vmem:[%s0 + $0x1f8] sm:$0xff]
  %v78 = vld [vmem:[%s1] sm:$0xff]
  %v79 = vld [vmem:[%s1 + $0x8] sm:$0xff]
  %v80 = vld [vmem:[%s1 + $0x10] sm:$0xff]
  %v81 = vld [vmem:[%s1 + $0x18] sm:$0xff]
  %v82 = vld [vmem:[%s1 + $0x20] sm:$0xff]
  %v83 = vld [vmem:[%s1 + $0x28] sm:$0xff]
  %v84 = vld [vmem:[%s1 + $0x30] sm:$0xff]
  %v85 = vld [vmem:[%s1 + $0x38] sm:$0xff]
  %v86 = vld [vmem:[%s1 + $0x40] sm:$0xff]
  %v87 = vld [vmem:[%s1 + $0x48] sm:$0xff]
  %v88 = vld [vmem:[%s1 + $0x50] sm:$0xff]
  %v89 = vld [vmem:[%s1 + $0x58] sm:$0xff]
  %v90 = vld [vmem:[%s1 + $0x60] sm:$0xff]
  %v91 = vld [vmem:[%s1 + $0x68] sm:$0xff]
  %v92 = vld [vmem:[%s1 + $0x70] sm:$0xff]
  %v93 = vld [vmem:[%s1 + $0x78] sm:$0xff]
  %v94 = vld [vmem:[%s1 + $0x80] sm:$0xff]
  %v95 = vld [vmem:[%s1 + $0x88] sm:$0xff]
  %v96 = vld [vmem:[%s1 + $0x90] sm:$0xff]
  %v97 = vld [vmem:[%s1 + $0x98] sm:$0xff]
  %v98 = vld [vmem:[%s1 + $0xa0] sm:$0xff]
  %v99 = vld [vmem:[%s1 + $0xa8] sm:$0xff]
  %v100 = vld [vmem:[%s1 + $0xb0] sm:$0xff]
  %v101 = vld [vmem:[%s1 + $0xb8] sm:$0xff]
  %v102 = vld [vmem:[%s1 + $0xc0] sm:$0xff]
  %v103 = vld [vmem:[%s1 + $0xc8] sm:$0xff]
  %v104 = vld [vmem:[%s1 + $0xd0] sm:$0xff]
  %v105 = vld [vmem:[%s1 + $0xd8] sm:$0xff]
  %v106 = vld [vmem:[%s1 + $0xe0] sm:$0xff]
  %v107 = vld [vmem:[%s1 + $0xe8] sm:$0xff]
  %v108 = vld [vmem:[%s1 + $0xf0] sm:$0xff]
  %v109 = vld [vmem:[%s1 + $0xf8] sm:$0xff]
  %111 = vset.pattern.permute.xlu0 0
  %112 = vperm.xlu0 %111, %v78
  %v113 = vpop.permute.xlu0 %112
  %116 = vset.pattern.permute.xlu0 0
  %117 = vperm.xlu0 %116, %v79
  %v118 = vpop.permute.xlu0 %117
  %121 = vset.pattern.permute.xlu0 0
  %122 = vperm.xlu0 %121, %v80
  %v123 = vpop.permute.xlu0 %122
  %126 = vset.pattern.permute.xlu0 0
  %127 = vperm.xlu0 %126, %v81
  %v128 = vpop.permute.xlu0 %127
  %131 = vset.pattern.permute.xlu0 0
  %132 = vperm.xlu0 %131, %v82
  %v133 = vpop.permute.xlu0 %132
  %136 = vset.pattern.permute.xlu0 0
  %137 = vperm.xlu0 %136, %v83
  %v138 = vpop.permute.xlu0 %137
  %141 = vset.pattern.permute.xlu0 0
  %142 = vperm.xlu0 %141, %v84
  %v143 = vpop.permute.xlu0 %142
  %146 = vset.pattern.permute.xlu0 0
  %147 = vperm.xlu0 %146, %v85
  %v148 = vpop.permute.xlu0 %147
  %151 = vset.pattern.permute.xlu0 0
  %152 = vperm.xlu0 %151, %v86
  %v153 = vpop.permute.xlu0 %152
  %156 = vset.pattern.permute.xlu0 0
  %157 = vperm.xlu0 %156, %v87
  %v158 = vpop.permute.xlu0 %157
  %161 = vset.pattern.permute.xlu0 0
  %162 = vperm.xlu0 %161, %v88
  %v163 = vpop.permute.xlu0 %162
  %166 = vset.pattern.permute.xlu0 0
  %167 = vperm.xlu0 %166, %v89
  %v168 = vpop.permute.xlu0 %167
  %171 = vset.pattern.permute.xlu0 0
  %172 = vperm.xlu0 %171, %v90
  %v173 = vpop.permute.xlu0 %172
  %176 = vset.pattern.permute.xlu0 0
  %177 = vperm.xlu0 %176, %v91
  %v178 = vpop.permute.xlu0 %177
  %181 = vset.pattern.permute.xlu0 0
  %182 = vperm.xlu0 %181, %v92
  %v183 = vpop.permute.xlu0 %182
  %186 = vset.pattern.permute.xlu0 0
  %187 = vperm.xlu0 %186, %v93
  %v188 = vpop.permute.xlu0 %187
  %191 = vset.pattern.permute.xlu0 0
  %192 = vperm.xlu0 %191, %v94
  %v193 = vpop.permute.xlu0 %192
  %196 = vset.pattern.permute.xlu0 0
  %197 = vperm.xlu0 %196, %v95
  %v198 = vpop.permute.xlu0 %197
  %201 = vset.pattern.permute.xlu0 0
  %202 = vperm.xlu0 %201, %v96
  %v203 = vpop.permute.xlu0 %202
  %206 = vset.pattern.permute.xlu0 0
  %207 = vperm.xlu0 %206, %v97
  %v208 = vpop.permute.xlu0 %207
  %211 = vset.pattern.permute.xlu0 0
  %212 = vperm.xlu0 %211, %v98
  %v213 = vpop.permute.xlu0 %212
  %216 = vset.pattern.permute.xlu0 0
  %217 = vperm.xlu0 %216, %v99
  %v218 = vpop.permute.xlu0 %217
  %221 = vset.pattern.permute.xlu0 0
  %222 = vperm.xlu0 %221, %v100
  %v223 = vpop.permute.xlu0 %222
  %226 = vset.pattern.permute.xlu0 0
  %227 = vperm.xlu0 %226, %v101
  %v228 = vpop.permute.xlu0 %227
  %231 = vset.pattern.permute.xlu0 0
  %232 = vperm.xlu0 %231, %v102
  %v233 = vpop.permute.xlu0 %232
  %236 = vset.pattern.permute.xlu0 0
  %237 = vperm.xlu0 %236, %v103
  %v238 = vpop.permute.xlu0 %237
  %241 = vset.pattern.permute.xlu0 0
  %242 = vperm.xlu0 %241, %v104
  %v243 = vpop.permute.xlu0 %242
  %246 = vset.pattern.permute.xlu0 0
  %247 = vperm.xlu0 %246, %v105
  %v248 = vpop.permute.xlu0 %247
  %251 = vset.pattern.permute.xlu0 0
  %252 = vperm.xlu0 %251, %v106
  %v253 = vpop.permute.xlu0 %252
  %256 = vset.pattern.permute.xlu0 0
  %257 = vperm.xlu0 %256, %v107
  %v258 = vpop.permute.xlu0 %257
  %261 = vset.pattern.permute.xlu0 0
  %262 = vperm.xlu0 %261, %v108
  %v263 = vpop.permute.xlu0 %262
  %266 = vset.pattern.permute.xlu0 0
  %267 = vperm.xlu0 %266, %v109
  %v268 = vpop.permute.xlu0 %267
  %v270 = vmul.f32 %v14, %v113
  %v271 = vmul.f32 %v15, %v113
  %v272 = vmul.f32 %v16, %v118
  %v273 = vmul.f32 %v17, %v118
  %v274 = vmul.f32 %v18, %v123
  %v275 = vmul.f32 %v19, %v123
  %v276 = vmul.f32 %v20, %v128
  %v277 = vmul.f32 %v21, %v128
  %v278 = vmul.f32 %v22, %v133
  %v279 = vmul.f32 %v23, %v133
  %v280 = vmul.f32 %v24, %v138
  %v281 = vmul.f32 %v25, %v138
  %v282 = vmul.f32 %v26, %v143
  %v283 = vmul.f32 %v27, %v143
  %v284 = vmul.f32 %v28, %v148
  %v285 = vmul.f32 %v29, %v148
  %v286 = vmul.f32 %v30, %v153
  %v287 = vmul.f32 %v31, %v153
  %v288 = vmul.f32 %v32, %v158
  %v289 = vmul.f32 %v33, %v158
  %v290 = vmul.f32 %v34, %v163
  %v291 = vmul.f32 %v35, %v163
  %v292 = vmul.f32 %v36, %v168
  %v293 = vmul.f32 %v37, %v168
  %v294 = vmul.f32 %v38, %v173
  %v295 = vmul.f32 %v39, %v173
  %v296 = vmul.f32 %v40, %v178
  %v297 = vmul.f32 %v41, %v178
  %v298 = vmul.f32 %v42, %v183
  %v299 = vmul.f32 %v43, %v183
  %v300 = vmul.f32 %v44, %v188
  %v301 = vmul.f32 %v45, %v188
  %v302 = vmul.f32 %v46, %v193
  %v303 = vmul.f32 %v47, %v193
  %v304 = vmul.f32 %v48, %v198
  %v305 = vmul.f32 %v49, %v198
  %v306 = vmul.f32 %v50, %v203
  %v307 = vmul.f32 %v51, %v203
  %v308 = vmul.f32 %v52, %v208
  %v309 = vmul.f32 %v53, %v208
  %v310 = vmul.f32 %v54, %v213
  %v311 = vmul.f32 %v55, %v213
  %v312 = vmul.f32 %v56, %v218
  %v313 = vmul.f32 %v57, %v218
  %v314 = vmul.f32 %v58, %v223
  %v315 = vmul.f32 %v59, %v223
  %v316 = vmul.f32 %v60, %v228
  %v317 = vmul.f32 %v61, %v228
  %v318 = vmul.f32 %v62, %v233
  %v319 = vmul.f32 %v63, %v233
  %v320 = vmul.f32 %v64, %v238
  %v321 = vmul.f32 %v65, %v238
  %v322 = vmul.f32 %v66, %v243
  %v323 = vmul.f32 %v67, %v243
  %v324 = vmul.f32 %v68, %v248
  %v325 = vmul.f32 %v69, %v248
  %v326 = vmul.f32 %v70, %v253
  %v327 = vmul.f32 %v71, %v253
  %v328 = vmul.f32 %v72, %v258
  %v329 = vmul.f32 %v73, %v258
  %v330 = vmul.f32 %v74, %v263
  %v331 = vmul.f32 %v75, %v263
  %v332 = vmul.f32 %v76, %v268
  %v333 = vmul.f32 %v77, %v268
  %v334 = vld [vmem:[%s2] sm:$0xff]
  %v335 = vld [vmem:[%s2 + $0x8] sm:$0xff]
  %v336 = vld [vmem:[%s2 + $0x10] sm:$0xff]
  %v337 = vld [vmem:[%s2 + $0x18] sm:$0xff]
  %v338 = vld [vmem:[%s2 + $0x20] sm:$0xff]
  %v339 = vld [vmem:[%s2 + $0x28] sm:$0xff]
  %v340 = vld [vmem:[%s2 + $0x30] sm:$0xff]
  %v341 = vld [vmem:[%s2 + $0x38] sm:$0xff]
  %v342 = vld [vmem:[%s2 + $0x40] sm:$0xff]
  %v343 = vld [vmem:[%s2 + $0x48] sm:$0xff]
  %v344 = vld [vmem:[%s2 + $0x50] sm:$0xff]
  %v345 = vld [vmem:[%s2 + $0x58] sm:$0xff]
  %v346 = vld [vmem:[%s2 + $0x60] sm:$0xff]
  %v347 = vld [vmem:[%s2 + $0x68] sm:$0xff]
  %v348 = vld [vmem:[%s2 + $0x70] sm:$0xff]
  %v349 = vld [vmem:[%s2 + $0x78] sm:$0xff]
  %v350 = vld [vmem:[%s2 + $0x80] sm:$0xff]
  %v351 = vld [vmem:[%s2 + $0x88] sm:$0xff]
  %v352 = vld [vmem:[%s2 + $0x90] sm:$0xff]
  %v353 = vld [vmem:[%s2 + $0x98] sm:$0xff]
  %v354 = vld [vmem:[%s2 + $0xa0] sm:$0xff]
  %v355 = vld [vmem:[%s2 + $0xa8] sm:$0xff]
  %v356 = vld [vmem:[%s2 + $0xb0] sm:$0xff]
  %v357 = vld [vmem:[%s2 + $0xb8] sm:$0xff]
  %v358 = vld [vmem:[%s2 + $0xc0] sm:$0xff]
  %v359 = vld [vmem:[%s2 + $0xc8] sm:$0xff]
  %v360 = vld [vmem:[%s2 + $0xd0] sm:$0xff]
  %v361 = vld [vmem:[%s2 + $0xd8] sm:$0xff]
  %v362 = vld [vmem:[%s2 + $0xe0] sm:$0xff]
  %v363 = vld [vmem:[%s2 + $0xe8] sm:$0xff]
  %v364 = vld [vmem:[%s2 + $0xf0] sm:$0xff]
  %v365 = vld [vmem:[%s2 + $0xf8] sm:$0xff]
  %367 = vset.pattern.permute.xlu0 0
  %368 = vperm.xlu0 %367, %v334
  %v369 = vpop.permute.xlu0 %368
  %372 = vset.pattern.permute.xlu0 0
  %373 = vperm.xlu0 %372, %v335
  %v374 = vpop.permute.xlu0 %373
  %377 = vset.pattern.permute.xlu0 0
  %378 = vperm.xlu0 %377, %v336
  %v379 = vpop.permute.xlu0 %378
  %382 = vset.pattern.permute.xlu0 0
  %383 = vperm.xlu0 %382, %v337
  %v384 = vpop.permute.xlu0 %383
  %387 = vset.pattern.permute.xlu0 0
  %388 = vperm.xlu0 %387, %v338
  %v389 = vpop.permute.xlu0 %388
  %392 = vset.pattern.permute.xlu0 0
  %393 = vperm.xlu0 %392, %v339
  %v394 = vpop.permute.xlu0 %393
  %397 = vset.pattern.permute.xlu0 0
  %398 = vperm.xlu0 %397, %v340
  %v399 = vpop.permute.xlu0 %398
  %402 = vset.pattern.permute.xlu0 0
  %403 = vperm.xlu0 %402, %v341
  %v404 = vpop.permute.xlu0 %403
  %407 = vset.pattern.permute.xlu0 0
  %408 = vperm.xlu0 %407, %v342
  %v409 = vpop.permute.xlu0 %408
  %412 = vset.pattern.permute.xlu0 0
  %413 = vperm.xlu0 %412, %v343
  %v414 = vpop.permute.xlu0 %413
  %417 = vset.pattern.permute.xlu0 0
  %418 = vperm.xlu0 %417, %v344
  %v419 = vpop.permute.xlu0 %418
  %422 = vset.pattern.permute.xlu0 0
  %423 = vperm.xlu0 %422, %v345
  %v424 = vpop.permute.xlu0 %423
  %427 = vset.pattern.permute.xlu0 0
  %428 = vperm.xlu0 %427, %v346
  %v429 = vpop.permute.xlu0 %428
  %432 = vset.pattern.permute.xlu0 0
  %433 = vperm.xlu0 %432, %v347
  %v434 = vpop.permute.xlu0 %433
  %437 = vset.pattern.permute.xlu0 0
  %438 = vperm.xlu0 %437, %v348
  %v439 = vpop.permute.xlu0 %438
  %442 = vset.pattern.permute.xlu0 0
  %443 = vperm.xlu0 %442, %v349
  %v444 = vpop.permute.xlu0 %443
  %447 = vset.pattern.permute.xlu0 0
  %448 = vperm.xlu0 %447, %v350
  %v449 = vpop.permute.xlu0 %448
  %452 = vset.pattern.permute.xlu0 0
  %453 = vperm.xlu0 %452, %v351
  %v454 = vpop.permute.xlu0 %453
  %457 = vset.pattern.permute.xlu0 0
  %458 = vperm.xlu0 %457, %v352
  %v459 = vpop.permute.xlu0 %458
  %462 = vset.pattern.permute.xlu0 0
  %463 = vperm.xlu0 %462, %v353
  %v464 = vpop.permute.xlu0 %463
  %467 = vset.pattern.permute.xlu0 0
  %468 = vperm.xlu0 %467, %v354
  %v469 = vpop.permute.xlu0 %468
  %472 = vset.pattern.permute.xlu0 0
  %473 = vperm.xlu0 %472, %v355
  %v474 = vpop.permute.xlu0 %473
  %477 = vset.pattern.permute.xlu0 0
  %478 = vperm.xlu0 %477, %v356
  %v479 = vpop.permute.xlu0 %478
  %482 = vset.pattern.permute.xlu0 0
  %483 = vperm.xlu0 %482, %v357
  %v484 = vpop.permute.xlu0 %483
  %487 = vset.pattern.permute.xlu0 0
  %488 = vperm.xlu0 %487, %v358
  %v489 = vpop.permute.xlu0 %488
  %492 = vset.pattern.permute.xlu0 0
  %493 = vperm.xlu0 %492, %v359
  %v494 = vpop.permute.xlu0 %493
  %497 = vset.pattern.permute.xlu0 0
  %498 = vperm.xlu0 %497, %v360
  %v499 = vpop.permute.xlu0 %498
  %502 = vset.pattern.permute.xlu0 0
  %503 = vperm.xlu0 %502, %v361
  %v504 = vpop.permute.xlu0 %503
  %507 = vset.pattern.permute.xlu0 0
  %508 = vperm.xlu0 %507, %v362
  %v509 = vpop.permute.xlu0 %508
  %512 = vset.pattern.permute.xlu0 0
  %513 = vperm.xlu0 %512, %v363
  %v514 = vpop.permute.xlu0 %513
  %517 = vset.pattern.permute.xlu0 0
  %518 = vperm.xlu0 %517, %v364
  %v519 = vpop.permute.xlu0 %518
  %522 = vset.pattern.permute.xlu0 0
  %523 = vperm.xlu0 %522, %v365
  %v524 = vpop.permute.xlu0 %523
  %v526 = vadd.f32 %v270, %v369
  %v527 = vadd.f32 %v271, %v369
  %v528 = vadd.f32 %v272, %v374
  %v529 = vadd.f32 %v273, %v374
  %v530 = vadd.f32 %v274, %v379
  %v531 = vadd.f32 %v275, %v379
  %v532 = vadd.f32 %v276, %v384
  %v533 = vadd.f32 %v277, %v384
  %v534 = vadd.f32 %v278, %v389
  %v535 = vadd.f32 %v279, %v389
  %v536 = vadd.f32 %v280, %v394
  %v537 = vadd.f32 %v281, %v394
  %v538 = vadd.f32 %v282, %v399
  %v539 = vadd.f32 %v283, %v399
  %v540 = vadd.f32 %v284, %v404
  %v541 = vadd.f32 %v285, %v404
  %v542 = vadd.f32 %v286, %v409
  %v543 = vadd.f32 %v287, %v409
  %v544 = vadd.f32 %v288, %v414
  %v545 = vadd.f32 %v289, %v414
  %v546 = vadd.f32 %v290, %v419
  %v547 = vadd.f32 %v291, %v419
  %v548 = vadd.f32 %v292, %v424
  %v549 = vadd.f32 %v293, %v424
  %v550 = vadd.f32 %v294, %v429
  %v551 = vadd.f32 %v295, %v429
  %v552 = vadd.f32 %v296, %v434
  %v553 = vadd.f32 %v297, %v434
  %v554 = vadd.f32 %v298, %v439
  %v555 = vadd.f32 %v299, %v439
  %v556 = vadd.f32 %v300, %v444
  %v557 = vadd.f32 %v301, %v444
  %v558 = vadd.f32 %v302, %v449
  %v559 = vadd.f32 %v303, %v449
  %v560 = vadd.f32 %v304, %v454
  %v561 = vadd.f32 %v305, %v454
  %v562 = vadd.f32 %v306, %v459
  %v563 = vadd.f32 %v307, %v459
  %v564 = vadd.f32 %v308, %v464
  %v565 = vadd.f32 %v309, %v464
  %v566 = vadd.f32 %v310, %v469
  %v567 = vadd.f32 %v311, %v469
  %v568 = vadd.f32 %v312, %v474
  %v569 = vadd.f32 %v313, %v474
  %v570 = vadd.f32 %v314, %v479
  %v571 = vadd.f32 %v315, %v479
  %v572 = vadd.f32 %v316, %v484
  %v573 = vadd.f32 %v317, %v484
  %v574 = vadd.f32 %v318, %v489
  %v575 = vadd.f32 %v319, %v489
  %v576 = vadd.f32 %v320, %v494
  %v577 = vadd.f32 %v321, %v494
  %v578 = vadd.f32 %v322, %v499
  %v579 = vadd.f32 %v323, %v499
  %v580 = vadd.f32 %v324, %v504
  %v581 = vadd.f32 %v325, %v504
  %v582 = vadd.f32 %v326, %v509
  %v583 = vadd.f32 %v327, %v509
  %v584 = vadd.f32 %v328, %v514
  %v585 = vadd.f32 %v329, %v514
  %v586 = vadd.f32 %v330, %v519
  %v587 = vadd.f32 %v331, %v519
  %v588 = vadd.f32 %v332, %v524
  %v589 = vadd.f32 %v333, %v524
  %590 = vst [vmem:[%s3] sm:$0xff] %v526
  %591 = vst [vmem:[%s3 + $0x8] sm:$0xff] %v527
  %592 = vst [vmem:[%s3 + $0x10] sm:$0xff] %v528
  %593 = vst [vmem:[%s3 + $0x18] sm:$0xff] %v529
  %594 = vst [vmem:[%s3 + $0x20] sm:$0xff] %v530
  %595 = vst [vmem:[%s3 + $0x28] sm:$0xff] %v531
  %596 = vst [vmem:[%s3 + $0x30] sm:$0xff] %v532
  %597 = vst [vmem:[%s3 + $0x38] sm:$0xff] %v533
  %598 = vst [vmem:[%s3 + $0x40] sm:$0xff] %v534
  %599 = vst [vmem:[%s3 + $0x48] sm:$0xff] %v535
  %600 = vst [vmem:[%s3 + $0x50] sm:$0xff] %v536
  %601 = vst [vmem:[%s3 + $0x58] sm:$0xff] %v537
  %602 = vst [vmem:[%s3 + $0x60] sm:$0xff] %v538
  %603 = vst [vmem:[%s3 + $0x68] sm:$0xff] %v539
  %604 = vst [vmem:[%s3 + $0x70] sm:$0xff] %v540
  %605 = vst [vmem:[%s3 + $0x78] sm:$0xff] %v541
  %606 = vst [vmem:[%s3 + $0x80] sm:$0xff] %v542
  %607 = vst [vmem:[%s3 + $0x88] sm:$0xff] %v543
  %608 = vst [vmem:[%s3 + $0x90] sm:$0xff] %v544
  %609 = vst [vmem:[%s3 + $0x98] sm:$0xff] %v545
  %610 = vst [vmem:[%s3 + $0xa0] sm:$0xff] %v546
  %611 = vst [vmem:[%s3 + $0xa8] sm:$0xff] %v547
  %612 = vst [vmem:[%s3 + $0xb0] sm:$0xff] %v548
  %613 = vst [vmem:[%s3 + $0xb8] sm:$0xff] %v549
  %614 = vst [vmem:[%s3 + $0xc0] sm:$0xff] %v550
  %615 = vst [vmem:[%s3 + $0xc8] sm:$0xff] %v551
  %616 = vst [vmem:[%s3 + $0xd0] sm:$0xff] %v552
  %617 = vst [vmem:[%s3 + $0xd8] sm:$0xff] %v553
  %618 = vst [vmem:[%s3 + $0xe0] sm:$0xff] %v554
  %619 = vst [vmem:[%s3 + $0xe8] sm:$0xff] %v555
  %620 = vst [vmem:[%s3 + $0xf0] sm:$0xff] %v556
  %621 = vst [vmem:[%s3 + $0xf8] sm:$0xff] %v557
  %622 = vst [vmem:[%s3 + $0x100] sm:$0xff] %v558
  %623 = vst [vmem:[%s3 + $0x108] sm:$0xff] %v559
  %624 = vst [vmem:[%s3 + $0x110] sm:$0xff] %v560
  %625 = vst [vmem:[%s3 + $0x118] sm:$0xff] %v561
  %626 = vst [vmem:[%s3 + $0x120] sm:$0xff] %v562
  %627 = vst [vmem:[%s3 + $0x128] sm:$0xff] %v563
  %628 = vst [vmem:[%s3 + $0x130] sm:$0xff] %v564
  %629 = vst [vmem:[%s3 + $0x138] sm:$0xff] %v565
  %630 = vst [vmem:[%s3 + $0x140] sm:$0xff] %v566
  %631 = vst [vmem:[%s3 + $0x148] sm:$0xff] %v567
  %632 = vst [vmem:[%s3 + $0x150] sm:$0xff] %v568
  %633 = vst [vmem:[%s3 + $0x158] sm:$0xff] %v569
  %634 = vst [vmem:[%s3 + $0x160] sm:$0xff] %v570
  %635 = vst [vmem:[%s3 + $0x168] sm:$0xff] %v571
  %636 = vst [vmem:[%s3 + $0x170] sm:$0xff] %v572
  %637 = vst [vmem:[%s3 + $0x178] sm:$0xff] %v573
  %638 = vst [vmem:[%s3 + $0x180] sm:$0xff] %v574
  %639 = vst [vmem:[%s3 + $0x188] sm:$0xff] %v575
  %640 = vst [vmem:[%s3 + $0x190] sm:$0xff] %v576
  %641 = vst [vmem:[%s3 + $0x198] sm:$0xff] %v577
  %642 = vst [vmem:[%s3 + $0x1a0] sm:$0xff] %v578
  %643 = vst [vmem:[%s3 + $0x1a8] sm:$0xff] %v579
  %644 = vst [vmem:[%s3 + $0x1b0] sm:$0xff] %v580
  %645 = vst [vmem:[%s3 + $0x1b8] sm:$0xff] %v581
  %646 = vst [vmem:[%s3 + $0x1c0] sm:$0xff] %v582
  %647 = vst [vmem:[%s3 + $0x1c8] sm:$0xff] %v583
  %648 = vst [vmem:[%s3 + $0x1d0] sm:$0xff] %v584
  %649 = vst [vmem:[%s3 + $0x1d8] sm:$0xff] %v585
  %650 = vst [vmem:[%s3 + $0x1e0] sm:$0xff] %v586
  %651 = vst [vmem:[%s3 + $0x1e8] sm:$0xff] %v587
  %652 = vst [vmem:[%s3 + $0x1f0] sm:$0xff] %v588
  %653 = vst [vmem:[%s3 + $0x1f8] sm:$0xff] %v589
  // Predicated region
  $region14: #{flim_forward.5} parent=0 // pred_check
    _
  $region15: #{flim_forward.5} parent=0 // pred_check_branch
    %655 = sbr.rel (0) target = $region17
  $region16: #{flim_forward.5} parent=0 // pred_region
    _
  $region17: #{flim_forward.5} parent=0 // pred_fallthru
    _
  // Predicated region
  $region18: #{flim_forward.5} parent=0 // pred_check
    _
  $region19: #{flim_forward.5} parent=0 // pred_check_branch
    %657 = sbr.rel (0) target = $region21
  $region20: #{flim_forward.5} parent=0 // pred_region
    _
  $region21: #{flim_forward.5} parent=0 // pred_fallthru
    _

</llo_original>
